<compile_context>
chip_gen: v7x
topology: tpu7x:2x2x1
jax: 0.10.0
libtpu: 0.0.40
codegen_flags: <defaults>
</compile_context>

<pallas_src>
import functools
import math

import jax
import jax.numpy as jnp
from jax.experimental import pallas as pl
from jax.experimental.pallas import tpu as pltpu


# -------------------- small BERT config (synthetic) --------------------
VOCAB = 128
HIDDEN = 32
N_LAYERS = 2
N_HEADS = 2
HEAD_DIM = HIDDEN // N_HEADS
INTER = 64
MAX_POS = 16
TYPE_VOCAB = 2
LN_EPS = 1e-12
NEG_INF = -1e9


# ============================ in-kernel helpers ============================

def _full_spec(shape):
    return pl.BlockSpec(shape, lambda *_: (0,) * len(shape))


def _mm(a, w):
    """MXU matmul: bf16 operands, f32 accumulation."""
    return jnp.dot(a.astype(jnp.bfloat16), w.astype(jnp.bfloat16),
                   preferred_element_type=jnp.float32)


def _mm_tb(a, w):
    """a @ w.T without materializing the transpose (trans_b folded into the dot)."""
    return jax.lax.dot_general(
        a.astype(jnp.bfloat16), w.astype(jnp.bfloat16),
        dimension_numbers=(((1,), (1,)), ((), ())),
        preferred_element_type=jnp.float32)


def _layernorm(x, g, b):
    mu = jnp.mean(x, axis=-1, keepdims=True)
    xc = x - mu
    var = jnp.mean(xc * xc, axis=-1, keepdims=True)
    return xc * jax.lax.rsqrt(var + LN_EPS) * g + b


def _gelu(x):
    # TODO(synk): HF BERT uses exact erf-GELU; tanh approximation differs by ~1e-3.
    return 0.5 * x * (1.0 + jnp.tanh(0.7978845608028654 * (x + 0.044715 * x * x * x)))


_COMPILER_PARAMS = pltpu.CompilerParams(dimension_semantics=("arbitrary",))


# ============================ Pallas kernels ============================

def _emb_ln_kernel(x_ref, g_ref, b_ref, o_ref):
    o_ref[...] = _layernorm(x_ref[...], g_ref[...], b_ref[...])


def emb_layernorm(x, g, b):
    M, H = x.shape
    return pl.pallas_call(
        _emb_ln_kernel,
        out_shape=jax.ShapeDtypeStruct((M, H), jnp.float32),
        grid=(1,),
        in_specs=[_full_spec((M, H)), _full_spec((1, H)), _full_spec((1, H))],
        out_specs=_full_spec((M, H)),
        compiler_params=_COMPILER_PARAMS,
    )(x, g, b)


def _encoder_layer_kernel(x_ref, mask_ref, wqkv_ref, bqkv_ref, wo_ref, bo_ref,
                          ln1g_ref, ln1b_ref, w1_ref, b1_ref, w2_ref, b2_ref,
                          ln2g_ref, ln2b_ref, o_ref, *, B, S, nh, dh):
    """One full BERT encoder layer, VMEM-resident end to end."""
    H = nh * dh
    scale = 1.0 / math.sqrt(dh)

    x = x_ref[...]                                  # (B*S, H) f32
    mask = mask_ref[...]                            # (B, S) additive (0 or -1e9)

    # --- fused QKV projection: one MXU pass, (B*S, 3H) ---
    qkv = _mm(x, wqkv_ref[...]) + bqkv_ref[...]

    # --- multi-head self-attention, static unroll over (batch, head) ---
    batch_ctx = []
    for b in range(B):
        maskb = mask[b:b + 1, :]                    # (1, S)
        r0 = b * S
        head_ctx = []
        for h in range(nh):
            c0 = h * dh
            qh = qkv[r0:r0 + S, c0:c0 + dh]                     # (S, dh)
            kh = qkv[r0:r0 + S, H + c0:H + c0 + dh]             # (S, dh)
            vh = qkv[r0:r0 + S, 2 * H + c0:2 * H + c0 + dh]     # (S, dh)
            s = _mm_tb(qh, kh) * scale + maskb                  # (S, S)
            m = jnp.max(s, axis=-1, keepdims=True)
            p = jnp.exp(s - m)
            denom = jnp.sum(p, axis=-1, keepdims=True)
            p = p * pl.reciprocal(denom, approx=True)
            head_ctx.append(_mm(p, vh))                         # (S, dh)
        batch_ctx.append(jnp.concatenate(head_ctx, axis=-1))    # (S, H)
    ctx = jnp.concatenate(batch_ctx, axis=0)                    # (B*S, H)

    # --- output projection + residual + LN ---
    attn_out = _mm(ctx, wo_ref[...]) + bo_ref[...]
    x1 = _layernorm(x + attn_out, ln1g_ref[...], ln1b_ref[...])

    # --- feed-forward + residual + LN ---
    ff = _gelu(_mm(x1, w1_ref[...]) + b1_ref[...])
    ff = _mm(ff, w2_ref[...]) + b2_ref[...]
    o_ref[...] = _layernorm(x1 + ff, ln2g_ref[...], ln2b_ref[...])


def encoder_layer(x, addmask, lp, B, S):
    BS, H = x.shape
    in_specs = [
        _full_spec((BS, H)),                  # x
        _full_spec((B, S)),                   # additive mask
        _full_spec((H, 3 * H)),               # wqkv
        _full_spec((1, 3 * H)),               # bqkv
        _full_spec((H, H)),                   # wo
        _full_spec((1, H)),                   # bo
        _full_spec((1, H)), _full_spec((1, H)),       # ln1 g/b
        _full_spec((H, INTER)), _full_spec((1, INTER)),  # w1/b1
        _full_spec((INTER, H)), _full_spec((1, H)),      # w2/b2
        _full_spec((1, H)), _full_spec((1, H)),       # ln2 g/b
    ]
    return pl.pallas_call(
        functools.partial(_encoder_layer_kernel, B=B, S=S, nh=N_HEADS, dh=HEAD_DIM),
        out_shape=jax.ShapeDtypeStruct((BS, H), jnp.float32),
        grid=(1,),
        in_specs=in_specs,
        out_specs=_full_spec((BS, H)),
        compiler_params=_COMPILER_PARAMS,
    )(x, addmask, lp["wqkv"], lp["bqkv"], lp["wo"], lp["bo"],
      lp["ln1_g"], lp["ln1_b"], lp["w1"], lp["b1"], lp["w2"], lp["b2"],
      lp["ln2_g"], lp["ln2_b"])


def _mlm_head_kernel(x_ref, wd_ref, bd_ref, lng_ref, lnb_ref, emb_ref, dbias_ref,
                     labels_ref, logits_ref, loss_ref):
    """MLM head (dense+gelu+LN), tied decoder and masked cross-entropy loss, fused."""
    h = _gelu(_mm(x_ref[...], wd_ref[...]) + bd_ref[...])
    h = _layernorm(h, lng_ref[...], lnb_ref[...])

    # tied decoder: h @ word_emb.T (word_emb stays (V, H); transpose folded into dot)
    logits = _mm_tb(h, emb_ref[...]) + dbias_ref[...]          # (BS, V), V=128 lane-dense
    logits_ref[...] = logits

    labels = labels_ref[...]                                   # (BS, 1) int32, -100 == ignore
    BS, V = logits.shape
    m = jnp.max(logits, axis=-1, keepdims=True)
    lse = m + jnp.log(jnp.sum(jnp.exp(logits - m), axis=-1, keepdims=True))
    vocab_ids = jax.lax.broadcasted_iota(jnp.int32, (BS, V), 1)
    # masked select of the label logit (labels == -100 never matches)
    label_logit = jnp.sum(jnp.where(vocab_ids == labels, logits, 0.0),
                          axis=-1, keepdims=True)
    valid = (labels != -100).astype(jnp.float32)
    per_tok = (lse - label_logit) * valid
    denom = jnp.maximum(jnp.sum(valid), 1.0)
    loss_ref[...] = (jnp.sum(per_tok) / denom).reshape(1, 1)


def mlm_head_and_loss(x, params, labels2d):
    BS, H = x.shape
    V = VOCAB
    return pl.pallas_call(
        _mlm_head_kernel,
        out_shape=(jax.ShapeDtypeStruct((BS, V), jnp.float32),
                   jax.ShapeDtypeStruct((1, 1), jnp.float32)),
        grid=(1,),
        in_specs=[
            _full_spec((BS, H)),
            _full_spec((H, H)), _full_spec((1, H)),
            _full_spec((1, H)), _full_spec((1, H)),
            _full_spec((V, H)), _full_spec((1, V)),
            _full_spec((BS, 1)),
        ],
        out_specs=(_full_spec((BS, V)), _full_spec((1, 1))),
        compiler_params=_COMPILER_PARAMS,
    )(x, params["mlm_dense_w"], params["mlm_dense_b"],
      params["mlm_ln_g"], params["mlm_ln_b"],
      params["word_emb"], params["decoder_bias"], labels2d)


# ============================ parameter init ============================

def init_params(key):
    scale = 0.02

    def norm(k, shape):
        return scale * jax.random.normal(k, shape, dtype=jnp.float32)

    keys = iter(jax.random.split(key, 8 + 8 * N_LAYERS))
    p = {
        "word_emb": norm(next(keys), (VOCAB, HIDDEN)),
        "pos_emb": norm(next(keys), (MAX_POS, HIDDEN)),
        "type_emb": norm(next(keys), (TYPE_VOCAB, HIDDEN)),
        "emb_ln_g": jnp.ones((1, HIDDEN), jnp.float32),
        "emb_ln_b": jnp.zeros((1, HIDDEN), jnp.float32),
        "mlm_dense_w": norm(next(keys), (HIDDEN, HIDDEN)),
        "mlm_dense_b": jnp.zeros((1, HIDDEN), jnp.float32),
        "mlm_ln_g": jnp.ones((1, HIDDEN), jnp.float32),
        "mlm_ln_b": jnp.zeros((1, HIDDEN), jnp.float32),
        "decoder_bias": jnp.zeros((1, VOCAB), jnp.float32),
        "layers": [],
    }
    for _ in range(N_LAYERS):
        wq = norm(next(keys), (HIDDEN, HIDDEN))
        wk = norm(next(keys), (HIDDEN, HIDDEN))
        wv = norm(next(keys), (HIDDEN, HIDDEN))
        lp = {
            # fused QKV weight built once at init (no per-call concat/transpose)
            "wqkv": jnp.concatenate([wq, wk, wv], axis=1),
            "bqkv": jnp.zeros((1, 3 * HIDDEN), jnp.float32),
            "wo": norm(next(keys), (HIDDEN, HIDDEN)),
            "bo": jnp.zeros((1, HIDDEN), jnp.float32),
            "ln1_g": jnp.ones((1, HIDDEN), jnp.float32),
            "ln1_b": jnp.zeros((1, HIDDEN), jnp.float32),
            "w1": norm(next(keys), (HIDDEN, INTER)),
            "b1": jnp.zeros((1, INTER), jnp.float32),
            "w2": norm(next(keys), (INTER, HIDDEN)),
            "b2": jnp.zeros((1, HIDDEN), jnp.float32),
            "ln2_g": jnp.ones((1, HIDDEN), jnp.float32),
            "ln2_b": jnp.zeros((1, HIDDEN), jnp.float32),
        }
        p["layers"].append(lp)
    return p


# ============================ forward (MLM.forward) ============================

def mlm_forward(params, input_ids, attention_mask, labels):
    """Equivalent of BertForMaskedLM(input_ids, attention_mask, labels) -> (loss, logits)."""
    B, S = input_ids.shape
    H = HIDDEN

    # --- embeddings (gathers = glue) + embedding LayerNorm kernel ---
    x = (params["word_emb"][input_ids]
         + params["pos_emb"][jnp.arange(S)][None, :, :]
         + params["type_emb"][0][None, None, :])
    x = x.reshape(B * S, H).astype(jnp.float32)
    x = emb_layernorm(x, params["emb_ln_g"], params["emb_ln_b"])

    # additive attention mask (B, S): 0 for keep, -1e9 for pad
    addmask = (1.0 - attention_mask.astype(jnp.float32)) * NEG_INF

    # --- fused encoder layers (one pallas_call each) ---
    for lp in params["layers"]:
        x = encoder_layer(x, addmask, lp, B, S)

    # --- fused MLM head + tied decoder + masked cross-entropy loss ---
    labels2d = labels.reshape(B * S, 1).astype(jnp.int32)
    logits, loss = mlm_head_and_loss(x, params, labels2d)
    return loss[0, 0], logits.reshape(B, S, VOCAB)


# ============================ main ============================

if __name__ == "__main__":
    key = jax.random.PRNGKey(0)
    pkey, ikey, lkey = jax.random.split(key, 3)

    params = init_params(pkey)

    B, S = 2, 8
    input_ids = jax.random.randint(ikey, (B, S), 0, VOCAB, dtype=jnp.int32)
    attention_mask = jnp.ones((B, S), jnp.int32).at[1, 6:].set(0)   # pad tail of 2nd sequence
    # labels: -100 everywhere except a few "masked" positions
    labels = jnp.full((B, S), -100, jnp.int32)
    labels = labels.at[0, 2].set(int(jax.random.randint(lkey, (), 0, VOCAB)))
    labels = labels.at[0, 5].set(7)
    labels = labels.at[1, 1].set(42)

    fwd = jax.jit(mlm_forward)
    loss, logits = fwd(params, input_ids, attention_mask, labels)
    jax.block_until_ready((loss, logits))

    assert logits.shape == (B, S, VOCAB)
    assert jnp.isfinite(loss)
    print("KERNEL_OK")
</pallas_src>

<mosaic_0001>
module attributes {stable_mosaic.version = 11 : i64} {
  func.func @_emb_ln_kernel(%arg0: i32, %arg1: memref<16x32xf32, #tpu.memory_space<vmem>>, %arg2: memref<1x32xf32, #tpu.memory_space<vmem>>, %arg3: memref<1x32xf32, #tpu.memory_space<vmem>>, %arg4: memref<16x32xf32, #tpu.memory_space<vmem>>) attributes {dimension_semantics = [#tpu.dimension_semantics<arbitrary>], iteration_bounds = array<i64: 1>, scalar_prefetch = 0 : i64, scratch_operands = 0 : i64, tpu.core_type = #tpu.core_type<tc>, window_params = [{pipeline_mode = #tpu.pipeline_mode<synchronous>, transform_indices = @transform_0, window_bounds = array<i64: 16, 32>}, {pipeline_mode = #tpu.pipeline_mode<synchronous>, transform_indices = @transform_1, window_bounds = array<i64: 1, 32>}, {pipeline_mode = #tpu.pipeline_mode<synchronous>, transform_indices = @transform_2, window_bounds = array<i64: 1, 32>}, {pipeline_mode = #tpu.pipeline_mode<synchronous>, transform_indices = @transform_3, window_bounds = array<i64: 16, 32>}]} {
    %c0 = arith.constant 0 : index
    %c0_0 = arith.constant 0 : index
    %0 = vector.load %arg1[%c0, %c0_0] : memref<16x32xf32, #tpu.memory_space<vmem>>, vector<16x32xf32>
    %c0_1 = arith.constant 0 : index
    %c0_2 = arith.constant 0 : index
    %1 = vector.load %arg2[%c0_1, %c0_2] : memref<1x32xf32, #tpu.memory_space<vmem>>, vector<1x32xf32>
    %c0_3 = arith.constant 0 : index
    %c0_4 = arith.constant 0 : index
    %2 = vector.load %arg3[%c0_3, %c0_4] : memref<1x32xf32, #tpu.memory_space<vmem>>, vector<1x32xf32>
    %cst = arith.constant dense<0.000000e+00> : vector<16xf32>
    %3 = vector.multi_reduction <add>, %0, %cst [1] : vector<16x32xf32> to vector<16xf32>
    %4 = vector.shape_cast %3 : vector<16xf32> to vector<16x1xf32>
    %cst_5 = arith.constant 3.200000e+01 : f32
    %5 = vector.broadcast %cst_5 : f32 to vector<16x1xf32>
    %6 = arith.divf %4, %5 : vector<16x1xf32>
    %7 = vector.broadcast %6 : vector<16x1xf32> to vector<16x32xf32>
    %8 = arith.subf %0, %7 : vector<16x32xf32>
    %9 = arith.mulf %8, %8 : vector<16x32xf32>
    %cst_6 = arith.constant dense<0.000000e+00> : vector<16xf32>
    %10 = vector.multi_reduction <add>, %9, %cst_6 [1] : vector<16x32xf32> to vector<16xf32>
    %11 = vector.shape_cast %10 : vector<16xf32> to vector<16x1xf32>
    %cst_7 = arith.constant 3.200000e+01 : f32
    %12 = vector.broadcast %cst_7 : f32 to vector<16x1xf32>
    %13 = arith.divf %11, %12 : vector<16x1xf32>
    %cst_8 = arith.constant 9.99999996E-13 : f32
    %14 = vector.broadcast %cst_8 : f32 to vector<16x1xf32>
    %15 = arith.addf %13, %14 : vector<16x1xf32>
    %16 = math.rsqrt %15 : vector<16x1xf32>
    %17 = vector.broadcast %16 : vector<16x1xf32> to vector<16x32xf32>
    %18 = arith.mulf %8, %17 : vector<16x32xf32>
    %19 = vector.broadcast %1 : vector<1x32xf32> to vector<16x32xf32>
    %20 = arith.mulf %18, %19 : vector<16x32xf32>
    %21 = vector.broadcast %2 : vector<1x32xf32> to vector<16x32xf32>
    %22 = arith.addf %20, %21 : vector<16x32xf32>
    %c0_9 = arith.constant 0 : index
    %c0_10 = arith.constant 0 : index
    %23 = vector.load %arg4[%c0_9, %c0_10] : memref<16x32xf32, #tpu.memory_space<vmem>>, vector<16x32xf32>
    tpu.vector_store %arg4[%c0_9, %c0_10], %22 {strides = array<i32>} : memref<16x32xf32, #tpu.memory_space<vmem>>, vector<16x32xf32>,
    return
  }
  func.func @transform_0(%arg0: i32) -> (i32, i32) {
    %c0_i32 = arith.constant 0 : i32
    %c0_i32_0 = arith.constant 0 : i32
    %c0_i32_1 = arith.constant 0 : i32
    return %c0_i32, %c0_i32_0 : i32, i32
  }
  func.func @transform_1(%arg0: i32) -> (i32, i32) {
    %c0_i32 = arith.constant 0 : i32
    %c0_i32_0 = arith.constant 0 : i32
    %c0_i32_1 = arith.constant 0 : i32
    return %c0_i32, %c0_i32_0 : i32, i32
  }
  func.func @transform_2(%arg0: i32) -> (i32, i32) {
    %c0_i32 = arith.constant 0 : i32
    %c0_i32_0 = arith.constant 0 : i32
    %c0_i32_1 = arith.constant 0 : i32
    return %c0_i32, %c0_i32_0 : i32, i32
  }
  func.func @transform_3(%arg0: i32) -> (i32, i32) {
    %c0_i32 = arith.constant 0 : i32
    %c0_i32_0 = arith.constant 0 : i32
    %c0_i32_1 = arith.constant 0 : i32
    return %c0_i32, %c0_i32_0 : i32, i32
  }
}

module attributes {stable_mosaic.version = 11 : i64} {
  func.func @_encoder_layer_kernel(%arg0: i32, %arg1: memref<16x32xf32, #tpu.memory_space<vmem>>, %arg2: memref<2x8xf32, #tpu.memory_space<vmem>>, %arg3: memref<32x96xf32, #tpu.memory_space<vmem>>, %arg4: memref<1x96xf32, #tpu.memory_space<vmem>>, %arg5: memref<32x32xf32, #tpu.memory_space<vmem>>, %arg6: memref<1x32xf32, #tpu.memory_space<vmem>>, %arg7: memref<1x32xf32, #tpu.memory_space<vmem>>, %arg8: memref<1x32xf32, #tpu.memory_space<vmem>>, %arg9: memref<32x64xf32, #tpu.memory_space<vmem>>, %arg10: memref<1x64xf32, #tpu.memory_space<vmem>>, %arg11: memref<64x32xf32, #tpu.memory_space<vmem>>, %arg12: memref<1x32xf32, #tpu.memory_space<vmem>>, %arg13: memref<1x32xf32, #tpu.memory_space<vmem>>, %arg14: memref<1x32xf32, #tpu.memory_space<vmem>>, %arg15: memref<16x32xf32, #tpu.memory_space<vmem>>) attributes {dimension_semantics = [#tpu.dimension_semantics<arbitrary>], iteration_bounds = array<i64: 1>, scalar_prefetch = 0 : i64, scratch_operands = 0 : i64, tpu.core_type = #tpu.core_type<tc>, window_params = [{pipeline_mode = #tpu.pipeline_mode<synchronous>, transform_indices = @transform_0, window_bounds = array<i64: 16, 32>}, {pipeline_mode = #tpu.pipeline_mode<synchronous>, transform_indices = @transform_1, window_bounds = array<i64: 2, 8>}, {pipeline_mode = #tpu.pipeline_mode<synchronous>, transform_indices = @transform_2, window_bounds = array<i64: 32, 96>}, {pipeline_mode = #tpu.pipeline_mode<synchronous>, transform_indices = @transform_3, window_bounds = array<i64: 1, 96>}, {pipeline_mode = #tpu.pipeline_mode<synchronous>, transform_indices = @transform_4, window_bounds = array<i64: 32, 32>}, {pipeline_mode = #tpu.pipeline_mode<synchronous>, transform_indices = @transform_5, window_bounds = array<i64: 1, 32>}, {pipeline_mode = #tpu.pipeline_mode<synchronous>, transform_indices = @transform_6, window_bounds = array<i64: 1, 32>}, {pipeline_mode = #tpu.pipeline_mode<synchronous>, transform_indices = @transform_7, window_bounds = array<i64: 1, 32>}, {pipeline_mode = #tpu.pipeline_mode<synchronous>, transform_indices = @transform_8, window_bounds = array<i64: 32, 64>}, {pipeline_mode = #tpu.pipeline_mode<synchronous>, transform_indices = @transform_9, window_bounds = array<i64: 1, 64>}, {pipeline_mode = #tpu.pipeline_mode<synchronous>, transform_indices = @transform_10, window_bounds = array<i64: 64, 32>}, {pipeline_mode = #tpu.pipeline_mode<synchronous>, transform_indices = @transform_11, window_bounds = array<i64: 1, 32>}, {pipeline_mode = #tpu.pipeline_mode<synchronous>, transform_indices = @transform_12, window_bounds = array<i64: 1, 32>}, {pipeline_mode = #tpu.pipeline_mode<synchronous>, transform_indices = @transform_13, window_bounds = array<i64: 1, 32>}, {pipeline_mode = #tpu.pipeline_mode<synchronous>, transform_indices = @transform_14, window_bounds = array<i64: 16, 32>}]} {
    %c0 = arith.constant 0 : index
    %c0_0 = arith.constant 0 : index
    %0 = vector.load %arg1[%c0, %c0_0] : memref<16x32xf32, #tpu.memory_space<vmem>>, vector<16x32xf32>
    %c0_1 = arith.constant 0 : index
    %c0_2 = arith.constant 0 : index
    %1 = vector.load %arg2[%c0_1, %c0_2] : memref<2x8xf32, #tpu.memory_space<vmem>>, vector<2x8xf32>
    %c0_3 = arith.constant 0 : index
    %c0_4 = arith.constant 0 : index
    %2 = vector.load %arg3[%c0_3, %c0_4] : memref<32x96xf32, #tpu.memory_space<vmem>>, vector<32x96xf32>
    %3 = arith.truncf %0 : vector<16x32xf32> to vector<16x32xbf16>
    %4 = arith.truncf %2 : vector<32x96xf32> to vector<32x96xbf16>
    %cst = arith.constant dense<0.000000e+00> : vector<16x96xf32>
    %5 = tpu.matmul %3, %4, %cst {dimension_numbers = #tpu.dot_dimension_numbers<[1], [0], [0], [1], [0, 0, 1, 1], [], []>} : vector<16x32xbf16>, vector<32x96xbf16>, vector<16x96xf32> -> vector<16x96xf32>
    %c0_5 = arith.constant 0 : index
    %c0_6 = arith.constant 0 : index
    %6 = vector.load %arg4[%c0_5, %c0_6] : memref<1x96xf32, #tpu.memory_space<vmem>>, vector<1x96xf32>
    %7 = vector.broadcast %6 : vector<1x96xf32> to vector<16x96xf32>
    %8 = arith.addf %5, %7 : vector<16x96xf32>
    %9 = vector.extract_strided_slice %1 {offsets = [0, 0], sizes = [1, 8], strides = [1, 1]} : vector<2x8xf32> to vector<1x8xf32>
    %10 = vector.extract_strided_slice %8 {offsets = [0, 0], sizes = [8, 16], strides = [1, 1]} : vector<16x96xf32> to vector<8x16xf32>
    %11 = vector.extract_strided_slice %8 {offsets = [0, 32], sizes = [8, 16], strides = [1, 1]} : vector<16x96xf32> to vector<8x16xf32>
    %12 = vector.extract_strided_slice %8 {offsets = [0, 64], sizes = [8, 16], strides = [1, 1]} : vector<16x96xf32> to vector<8x16xf32>
    %13 = arith.truncf %10 : vector<8x16xf32> to vector<8x16xbf16>
    %14 = arith.truncf %11 : vector<8x16xf32> to vector<8x16xbf16>
    %cst_7 = arith.constant dense<0.000000e+00> : vector<8x8xf32>
    %15 = tpu.matmul %13, %14, %cst_7 {dimension_numbers = #tpu.dot_dimension_numbers<[1], [1], [0], [0], [0, 0, 1, 0], [], []>} : vector<8x16xbf16>, vector<8x16xbf16>, vector<8x8xf32> -> vector<8x8xf32>
    %cst_8 = arith.constant 2.500000e-01 : f32
    %16 = vector.broadcast %cst_8 : f32 to vector<8x8xf32>
    %17 = arith.mulf %15, %16 : vector<8x8xf32>
    %18 = vector.broadcast %9 : vector<1x8xf32> to vector<8x8xf32>
    %19 = arith.addf %17, %18 : vector<8x8xf32>
    %cst_9 = arith.constant dense<0xFF800000> : vector<8xf32>
    %20 = vector.multi_reduction <maximumf>, %19, %cst_9 [1] : vector<8x8xf32> to vector<8xf32>
    %21 = vector.shape_cast %20 : vector<8xf32> to vector<8x1xf32>
    %22 = vector.broadcast %21 : vector<8x1xf32> to vector<8x8xf32>
    %23 = arith.subf %19, %22 : vector<8x8xf32>
    %24 = math.exp %23 : vector<8x8xf32>
    %cst_10 = arith.constant dense<0.000000e+00> : vector<8xf32>
    %25 = vector.multi_reduction <add>, %24, %cst_10 [1] : vector<8x8xf32> to vector<8xf32>
    %26 = vector.shape_cast %25 : vector<8xf32> to vector<8x1xf32>
    %27 = tpu.reciprocal %26 {approx = true} : vector<8x1xf32> -> vector<8x1xf32>
    %28 = vector.broadcast %27 : vector<8x1xf32> to vector<8x8xf32>
    %29 = arith.mulf %24, %28 : vector<8x8xf32>
    %30 = arith.truncf %29 : vector<8x8xf32> to vector<8x8xbf16>
    %31 = arith.truncf %12 : vector<8x16xf32> to vector<8x16xbf16>
    %cst_11 = arith.constant dense<0.000000e+00> : vector<8x16xf32>
    %32 = tpu.matmul %30, %31, %cst_11 {dimension_numbers = #tpu.dot_dimension_numbers<[1], [0], [0], [1], [0, 0, 1, 1], [], []>} : vector<8x8xbf16>, vector<8x16xbf16>, vector<8x16xf32> -> vector<8x16xf32>
    %33 = vector.extract_strided_slice %8 {offsets = [0, 16], sizes = [8, 16], strides = [1, 1]} : vector<16x96xf32> to vector<8x16xf32>
    %34 = vector.extract_strided_slice %8 {offsets = [0, 48], sizes = [8, 16], strides = [1, 1]} : vector<16x96xf32> to vector<8x16xf32>
    %35 = vector.extract_strided_slice %8 {offsets = [0, 80], sizes = [8, 16], strides = [1, 1]} : vector<16x96xf32> to vector<8x16xf32>
    %36 = arith.truncf %33 : vector<8x16xf32> to vector<8x16xbf16>
    %37 = arith.truncf %34 : vector<8x16xf32> to vector<8x16xbf16>
    %cst_12 = arith.constant dense<0.000000e+00> : vector<8x8xf32>
    %38 = tpu.matmul %36, %37, %cst_12 {dimension_numbers = #tpu.dot_dimension_numbers<[1], [1], [0], [0], [0, 0, 1, 0], [], []>} : vector<8x16xbf16>, vector<8x16xbf16>, vector<8x8xf32> -> vector<8x8xf32>
    %cst_13 = arith.constant 2.500000e-01 : f32
    %39 = vector.broadcast %cst_13 : f32 to vector<8x8xf32>
    %40 = arith.mulf %38, %39 : vector<8x8xf32>
    %41 = vector.broadcast %9 : vector<1x8xf32> to vector<8x8xf32>
    %42 = arith.addf %40, %41 : vector<8x8xf32>
    %cst_14 = arith.constant dense<0xFF800000> : vector<8xf32>
    %43 = vector.multi_reduction <maximumf>, %42, %cst_14 [1] : vector<8x8xf32> to vector<8xf32>
    %44 = vector.shape_cast %43 : vector<8xf32> to vector<8x1xf32>
    %45 = vector.broadcast %44 : vector<8x1xf32> to vector<8x8xf32>
    %46 = arith.subf %42, %45 : vector<8x8xf32>
    %47 = math.exp %46 : vector<8x8xf32>
    %cst_15 = arith.constant dense<0.000000e+00> : vector<8xf32>
    %48 = vector.multi_reduction <add>, %47, %cst_15 [1] : vector<8x8xf32> to vector<8xf32>
    %49 = vector.shape_cast %48 : vector<8xf32> to vector<8x1xf32>
    %50 = tpu.reciprocal %49 {approx = true} : vector<8x1xf32> -> vector<8x1xf32>
    %51 = vector.broadcast %50 : vector<8x1xf32> to vector<8x8xf32>
    %52 = arith.mulf %47, %51 : vector<8x8xf32>
    %53 = arith.truncf %52 : vector<8x8xf32> to vector<8x8xbf16>
    %54 = arith.truncf %35 : vector<8x16xf32> to vector<8x16xbf16>
    %cst_16 = arith.constant dense<0.000000e+00> : vector<8x16xf32>
    %55 = tpu.matmul %53, %54, %cst_16 {dimension_numbers = #tpu.dot_dimension_numbers<[1], [0], [0], [1], [0, 0, 1, 1], [], []>} : vector<8x8xbf16>, vector<8x16xbf16>, vector<8x16xf32> -> vector<8x16xf32>
    %56 = tpu.concatenate %32, %55 in 1 : vector<8x16xf32>, vector<8x16xf32> -> vector<8x32xf32>
    %57 = vector.extract_strided_slice %1 {offsets = [1, 0], sizes = [1, 8], strides = [1, 1]} : vector<2x8xf32> to vector<1x8xf32>
    %58 = vector.extract_strided_slice %8 {offsets = [8, 0], sizes = [8, 16], strides = [1, 1]} : vector<16x96xf32> to vector<8x16xf32>
    %59 = vector.extract_strided_slice %8 {offsets = [8, 32], sizes = [8, 16], strides = [1, 1]} : vector<16x96xf32> to vector<8x16xf32>
    %60 = vector.extract_strided_slice %8 {offsets = [8, 64], sizes = [8, 16], strides = [1, 1]} : vector<16x96xf32> to vector<8x16xf32>
    %61 = arith.truncf %58 : vector<8x16xf32> to vector<8x16xbf16>
    %62 = arith.truncf %59 : vector<8x16xf32> to vector<8x16xbf16>
    %cst_17 = arith.constant dense<0.000000e+00> : vector<8x8xf32>
    %63 = tpu.matmul %61, %62, %cst_17 {dimension_numbers = #tpu.dot_dimension_numbers<[1], [1], [0], [0], [0, 0, 1, 0], [], []>} : vector<8x16xbf16>, vector<8x16xbf16>, vector<8x8xf32> -> vector<8x8xf32>
    %cst_18 = arith.constant 2.500000e-01 : f32
    %64 = vector.broadcast %cst_18 : f32 to vector<8x8xf32>
    %65 = arith.mulf %63, %64 : vector<8x8xf32>
    %66 = vector.broadcast %57 : vector<1x8xf32> to vector<8x8xf32>
    %67 = arith.addf %65, %66 : vector<8x8xf32>
    %cst_19 = arith.constant dense<0xFF800000> : vector<8xf32>
    %68 = vector.multi_reduction <maximumf>, %67, %cst_19 [1] : vector<8x8xf32> to vector<8xf32>
    %69 = vector.shape_cast %68 : vector<8xf32> to vector<8x1xf32>
    %70 = vector.broadcast %69 : vector<8x1xf32> to vector<8x8xf32>
    %71 = arith.subf %67, %70 : vector<8x8xf32>
    %72 = math.exp %71 : vector<8x8xf32>
    %cst_20 = arith.constant dense<0.000000e+00> : vector<8xf32>
    %73 = vector.multi_reduction <add>, %72, %cst_20 [1] : vector<8x8xf32> to vector<8xf32>
    %74 = vector.shape_cast %73 : vector<8xf32> to vector<8x1xf32>
    %75 = tpu.reciprocal %74 {approx = true} : vector<8x1xf32> -> vector<8x1xf32>
    %76 = vector.broadcast %75 : vector<8x1xf32> to vector<8x8xf32>
    %77 = arith.mulf %72, %76 : vector<8x8xf32>
    %78 = arith.truncf %77 : vector<8x8xf32> to vector<8x8xbf16>
    %79 = arith.truncf %60 : vector<8x16xf32> to vector<8x16xbf16>
    %cst_21 = arith.constant dense<0.000000e+00> : vector<8x16xf32>
    %80 = tpu.matmul %78, %79, %cst_21 {dimension_numbers = #tpu.dot_dimension_numbers<[1], [0], [0], [1], [0, 0, 1, 1], [], []>} : vector<8x8xbf16>, vector<8x16xbf16>, vector<8x16xf32> -> vector<8x16xf32>
    %81 = vector.extract_strided_slice %8 {offsets = [8, 16], sizes = [8, 16], strides = [1, 1]} : vector<16x96xf32> to vector<8x16xf32>
    %82 = vector.extract_strided_slice %8 {offsets = [8, 48], sizes = [8, 16], strides = [1, 1]} : vector<16x96xf32> to vector<8x16xf32>
    %83 = vector.extract_strided_slice %8 {offsets = [8, 80], sizes = [8, 16], strides = [1, 1]} : vector<16x96xf32> to vector<8x16xf32>
    %84 = arith.truncf %81 : vector<8x16xf32> to vector<8x16xbf16>
    %85 = arith.truncf %82 : vector<8x16xf32> to vector<8x16xbf16>
    %cst_22 = arith.constant dense<0.000000e+00> : vector<8x8xf32>
    %86 = tpu.matmul %84, %85, %cst_22 {dimension_numbers = #tpu.dot_dimension_numbers<[1], [1], [0], [0], [0, 0, 1, 0], [], []>} : vector<8x16xbf16>, vector<8x16xbf16>, vector<8x8xf32> -> vector<8x8xf32>
    %cst_23 = arith.constant 2.500000e-01 : f32
    %87 = vector.broadcast %cst_23 : f32 to vector<8x8xf32>
    %88 = arith.mulf %86, %87 : vector<8x8xf32>
    %89 = vector.broadcast %57 : vector<1x8xf32> to vector<8x8xf32>
    %90 = arith.addf %88, %89 : vector<8x8xf32>
    %cst_24 = arith.constant dense<0xFF800000> : vector<8xf32>
    %91 = vector.multi_reduction <maximumf>, %90, %cst_24 [1] : vector<8x8xf32> to vector<8xf32>
    %92 = vector.shape_cast %91 : vector<8xf32> to vector<8x1xf32>
    %93 = vector.broadcast %92 : vector<8x1xf32> to vector<8x8xf32>
    %94 = arith.subf %90, %93 : vector<8x8xf32>
    %95 = math.exp %94 : vector<8x8xf32>
    %cst_25 = arith.constant dense<0.000000e+00> : vector<8xf32>
    %96 = vector.multi_reduction <add>, %95, %cst_25 [1] : vector<8x8xf32> to vector<8xf32>
    %97 = vector.shape_cast %96 : vector<8xf32> to vector<8x1xf32>
    %98 = tpu.reciprocal %97 {approx = true} : vector<8x1xf32> -> vector<8x1xf32>
    %99 = vector.broadcast %98 : vector<8x1xf32> to vector<8x8xf32>
    %100 = arith.mulf %95, %99 : vector<8x8xf32>
    %101 = arith.truncf %100 : vector<8x8xf32> to vector<8x8xbf16>
    %102 = arith.truncf %83 : vector<8x16xf32> to vector<8x16xbf16>
    %cst_26 = arith.constant dense<0.000000e+00> : vector<8x16xf32>
    %103 = tpu.matmul %101, %102, %cst_26 {dimension_numbers = #tpu.dot_dimension_numbers<[1], [0], [0], [1], [0, 0, 1, 1], [], []>} : vector<8x8xbf16>, vector<8x16xbf16>, vector<8x16xf32> -> vector<8x16xf32>
    %104 = tpu.concatenate %80, %103 in 1 : vector<8x16xf32>, vector<8x16xf32> -> vector<8x32xf32>
    %105 = tpu.concatenate %56, %104 in 0 : vector<8x32xf32>, vector<8x32xf32> -> vector<16x32xf32>
    %c0_27 = arith.constant 0 : index
    %c0_28 = arith.constant 0 : index
    %106 = vector.load %arg5[%c0_27, %c0_28] : memref<32x32xf32, #tpu.memory_space<vmem>>, vector<32x32xf32>
    %107 = arith.truncf %105 : vector<16x32xf32> to vector<16x32xbf16>
    %108 = arith.truncf %106 : vector<32x32xf32> to vector<32x32xbf16>
    %cst_29 = arith.constant dense<0.000000e+00> : vector<16x32xf32>
    %109 = tpu.matmul %107, %108, %cst_29 {dimension_numbers = #tpu.dot_dimension_numbers<[1], [0], [0], [1], [0, 0, 1, 1], [], []>} : vector<16x32xbf16>, vector<32x32xbf16>, vector<16x32xf32> -> vector<16x32xf32>
    %c0_30 = arith.constant 0 : index
    %c0_31 = arith.constant 0 : index
    %110 = vector.load %arg6[%c0_30, %c0_31] : memref<1x32xf32, #tpu.memory_space<vmem>>, vector<1x32xf32>
    %111 = vector.broadcast %110 : vector<1x32xf32> to vector<16x32xf32>
    %112 = arith.addf %109, %111 : vector<16x32xf32>
    %113 = arith.addf %0, %112 : vector<16x32xf32>
    %c0_32 = arith.constant 0 : index
    %c0_33 = arith.constant 0 : index
    %114 = vector.load %arg7[%c0_32, %c0_33] : memref<1x32xf32, #tpu.memory_space<vmem>>, vector<1x32xf32>
    %c0_34 = arith.constant 0 : index
    %c0_35 = arith.constant 0 : index
    %115 = vector.load %arg8[%c0_34, %c0_35] : memref<1x32xf32, #tpu.memory_space<vmem>>, vector<1x32xf32>
    %cst_36 = arith.constant dense<0.000000e+00> : vector<16xf32>
    %116 = vector.multi_reduction <add>, %113, %cst_36 [1] : vector<16x32xf32> to vector<16xf32>
    %117 = vector.shape_cast %116 : vector<16xf32> to vector<16x1xf32>
    %cst_37 = arith.constant 3.200000e+01 : f32
    %118 = vector.broadcast %cst_37 : f32 to vector<16x1xf32>
    %119 = arith.divf %117, %118 : vector<16x1xf32>
    %120 = vector.broadcast %119 : vector<16x1xf32> to vector<16x32xf32>
    %121 = arith.subf %113, %120 : vector<16x32xf32>
    %122 = arith.mulf %121, %121 : vector<16x32xf32>
    %cst_38 = arith.constant dense<0.000000e+00> : vector<16xf32>
    %123 = vector.multi_reduction <add>, %122, %cst_38 [1] : vector<16x32xf32> to vector<16xf32>
    %124 = vector.shape_cast %123 : vector<16xf32> to vector<16x1xf32>
    %cst_39 = arith.constant 3.200000e+01 : f32
    %125 = vector.broadcast %cst_39 : f32 to vector<16x1xf32>
    %126 = arith.divf %124, %125 : vector<16x1xf32>
    %cst_40 = arith.constant 9.99999996E-13 : f32
    %127 = vector.broadcast %cst_40 : f32 to vector<16x1xf32>
    %128 = arith.addf %126, %127 : vector<16x1xf32>
    %129 = math.rsqrt %128 : vector<16x1xf32>
    %130 = vector.broadcast %129 : vector<16x1xf32> to vector<16x32xf32>
    %131 = arith.mulf %121, %130 : vector<16x32xf32>
    %132 = vector.broadcast %114 : vector<1x32xf32> to vector<16x32xf32>
    %133 = arith.mulf %131, %132 : vector<16x32xf32>
    %134 = vector.broadcast %115 : vector<1x32xf32> to vector<16x32xf32>
    %135 = arith.addf %133, %134 : vector<16x32xf32>
    %c0_41 = arith.constant 0 : index
    %c0_42 = arith.constant 0 : index
    %136 = vector.load %arg9[%c0_41, %c0_42] : memref<32x64xf32, #tpu.memory_space<vmem>>, vector<32x64xf32>
    %137 = arith.truncf %135 : vector<16x32xf32> to vector<16x32xbf16>
    %138 = arith.truncf %136 : vector<32x64xf32> to vector<32x64xbf16>
    %cst_43 = arith.constant dense<0.000000e+00> : vector<16x64xf32>
    %139 = tpu.matmul %137, %138, %cst_43 {dimension_numbers = #tpu.dot_dimension_numbers<[1], [0], [0], [1], [0, 0, 1, 1], [], []>} : vector<16x32xbf16>, vector<32x64xbf16>, vector<16x64xf32> -> vector<16x64xf32>
    %c0_44 = arith.constant 0 : index
    %c0_45 = arith.constant 0 : index
    %140 = vector.load %arg10[%c0_44, %c0_45] : memref<1x64xf32, #tpu.memory_space<vmem>>, vector<1x64xf32>
    %141 = vector.broadcast %140 : vector<1x64xf32> to vector<16x64xf32>
    %142 = arith.addf %139, %141 : vector<16x64xf32>
    %cst_46 = arith.constant 5.000000e-01 : f32
    %143 = vector.broadcast %cst_46 : f32 to vector<16x64xf32>
    %144 = arith.mulf %143, %142 : vector<16x64xf32>
    %cst_47 = arith.constant 4.471500e-02 : f32
    %145 = vector.broadcast %cst_47 : f32 to vector<16x64xf32>
    %146 = arith.mulf %145, %142 : vector<16x64xf32>
    %147 = arith.mulf %146, %142 : vector<16x64xf32>
    %148 = arith.mulf %147, %142 : vector<16x64xf32>
    %149 = arith.addf %142, %148 : vector<16x64xf32>
    %cst_48 = arith.constant 0.797884583 : f32
    %150 = vector.broadcast %cst_48 : f32 to vector<16x64xf32>
    %151 = arith.mulf %150, %149 : vector<16x64xf32>
    %152 = math.tanh %151 : vector<16x64xf32>
    %cst_49 = arith.constant 1.000000e+00 : f32
    %153 = vector.broadcast %cst_49 : f32 to vector<16x64xf32>
    %154 = arith.addf %153, %152 : vector<16x64xf32>
    %155 = arith.mulf %144, %154 : vector<16x64xf32>
    %c0_50 = arith.constant 0 : index
    %c0_51 = arith.constant 0 : index
    %156 = vector.load %arg11[%c0_50, %c0_51] : memref<64x32xf32, #tpu.memory_space<vmem>>, vector<64x32xf32>
    %157 = arith.truncf %155 : vector<16x64xf32> to vector<16x64xbf16>
    %158 = arith.truncf %156 : vector<64x32xf32> to vector<64x32xbf16>
    %cst_52 = arith.constant dense<0.000000e+00> : vector<16x32xf32>
    %159 = tpu.matmul %157, %158, %cst_52 {dimension_numbers = #tpu.dot_dimension_numbers<[1], [0], [0], [1], [0, 0, 1, 1], [], []>} : vector<16x64xbf16>, vector<64x32xbf16>, vector<16x32xf32> -> vector<16x32xf32>
    %c0_53 = arith.constant 0 : index
    %c0_54 = arith.constant 0 : index
    %160 = vector.load %arg12[%c0_53, %c0_54] : memref<1x32xf32, #tpu.memory_space<vmem>>, vector<1x32xf32>
    %161 = vector.broadcast %160 : vector<1x32xf32> to vector<16x32xf32>
    %162 = arith.addf %159, %161 : vector<16x32xf32>
    %163 = arith.addf %135, %162 : vector<16x32xf32>
    %c0_55 = arith.constant 0 : index
    %c0_56 = arith.constant 0 : index
    %164 = vector.load %arg13[%c0_55, %c0_56] : memref<1x32xf32, #tpu.memory_space<vmem>>, vector<1x32xf32>
    %c0_57 = arith.constant 0 : index
    %c0_58 = arith.constant 0 : index
    %165 = vector.load %arg14[%c0_57, %c0_58] : memref<1x32xf32, #tpu.memory_space<vmem>>, vector<1x32xf32>
    %cst_59 = arith.constant dense<0.000000e+00> : vector<16xf32>
    %166 = vector.multi_reduction <add>, %163, %cst_59 [1] : vector<16x32xf32> to vector<16xf32>
    %167 = vector.shape_cast %166 : vector<16xf32> to vector<16x1xf32>
    %cst_60 = arith.constant 3.200000e+01 : f32
    %168 = vector.broadcast %cst_60 : f32 to vector<16x1xf32>
    %169 = arith.divf %167, %168 : vector<16x1xf32>
    %170 = vector.broadcast %169 : vector<16x1xf32> to vector<16x32xf32>
    %171 = arith.subf %163, %170 : vector<16x32xf32>
    %172 = arith.mulf %171, %171 : vector<16x32xf32>
    %cst_61 = arith.constant dense<0.000000e+00> : vector<16xf32>
    %173 = vector.multi_reduction <add>, %172, %cst_61 [1] : vector<16x32xf32> to vector<16xf32>
    %174 = vector.shape_cast %173 : vector<16xf32> to vector<16x1xf32>
    %cst_62 = arith.constant 3.200000e+01 : f32
    %175 = vector.broadcast %cst_62 : f32 to vector<16x1xf32>
    %176 = arith.divf %174, %175 : vector<16x1xf32>
    %cst_63 = arith.constant 9.99999996E-13 : f32
    %177 = vector.broadcast %cst_63 : f32 to vector<16x1xf32>
    %178 = arith.addf %176, %177 : vector<16x1xf32>
    %179 = math.rsqrt %178 : vector<16x1xf32>
    %180 = vector.broadcast %179 : vector<16x1xf32> to vector<16x32xf32>
    %181 = arith.mulf %171, %180 : vector<16x32xf32>
    %182 = vector.broadcast %164 : vector<1x32xf32> to vector<16x32xf32>
    %183 = arith.mulf %181, %182 : vector<16x32xf32>
    %184 = vector.broadcast %165 : vector<1x32xf32> to vector<16x32xf32>
    %185 = arith.addf %183, %184 : vector<16x32xf32>
    %c0_64 = arith.constant 0 : index
    %c0_65 = arith.constant 0 : index
    %186 = vector.load %arg15[%c0_64, %c0_65] : memref<16x32xf32, #tpu.memory_space<vmem>>, vector<16x32xf32>
    tpu.vector_store %arg15[%c0_64, %c0_65], %185 {strides = array<i32>} : memref<16x32xf32, #tpu.memory_space<vmem>>, vector<16x32xf32>,
    return
  }
  func.func @transform_0(%arg0: i32) -> (i32, i32) {
    %c0_i32 = arith.constant 0 : i32
    %c0_i32_0 = arith.constant 0 : i32
    %c0_i32_1 = arith.constant 0 : i32
    return %c0_i32, %c0_i32_0 : i32, i32
  }
  func.func @transform_1(%arg0: i32) -> (i32, i32) {
    %c0_i32 = arith.constant 0 : i32
    %c0_i32_0 = arith.constant 0 : i32
    %c0_i32_1 = arith.constant 0 : i32
    return %c0_i32, %c0_i32_0 : i32, i32
  }
  func.func @transform_2(%arg0: i32) -> (i32, i32) {
    %c0_i32 = arith.constant 0 : i32
    %c0_i32_0 = arith.constant 0 : i32
    %c0_i32_1 = arith.constant 0 : i32
    return %c0_i32, %c0_i32_0 : i32, i32
  }
  func.func @transform_3(%arg0: i32) -> (i32, i32) {
    %c0_i32 = arith.constant 0 : i32
    %c0_i32_0 = arith.constant 0 : i32
    %c0_i32_1 = arith.constant 0 : i32
    return %c0_i32, %c0_i32_0 : i32, i32
  }
  func.func @transform_4(%arg0: i32) -> (i32, i32) {
    %c0_i32 = arith.constant 0 : i32
    %c0_i32_0 = arith.constant 0 : i32
    %c0_i32_1 = arith.constant 0 : i32
    return %c0_i32, %c0_i32_0 : i32, i32
  }
  func.func @transform_5(%arg0: i32) -> (i32, i32) {
    %c0_i32 = arith.constant 0 : i32
    %c0_i32_0 = arith.constant 0 : i32
    %c0_i32_1 = arith.constant 0 : i32
    return %c0_i32, %c0_i32_0 : i32, i32
  }
  func.func @transform_6(%arg0: i32) -> (i32, i32) {
    %c0_i32 = arith.constant 0 : i32
    %c0_i32_0 = arith.constant 0 : i32
    %c0_i32_1 = arith.constant 0 : i32
    return %c0_i32, %c0_i32_0 : i32, i32
  }
  func.func @transform_7(%arg0: i32) -> (i32, i32) {
    %c0_i32 = arith.constant 0 : i32
    %c0_i32_0 = arith.constant 0 : i32
    %c0_i32_1 = arith.constant 0 : i32
    return %c0_i32, %c0_i32_0 : i32, i32
  }
  func.func @transform_8(%arg0: i32) -> (i32, i32) {
    %c0_i32 = arith.constant 0 : i32
    %c0_i32_0 = arith.constant 0 : i32
    %c0_i32_1 = arith.constant 0 : i32
    return %c0_i32, %c0_i32_0 : i32, i32
  }
  func.func @transform_9(%arg0: i32) -> (i32, i32) {
    %c0_i32 = arith.constant 0 : i32
    %c0_i32_0 = arith.constant 0 : i32
    %c0_i32_1 = arith.constant 0 : i32
    return %c0_i32, %c0_i32_0 : i32, i32
  }
  func.func @transform_10(%arg0: i32) -> (i32, i32) {
    %c0_i32 = arith.constant 0 : i32
    %c0_i32_0 = arith.constant 0 : i32
    %c0_i32_1 = arith.constant 0 : i32
    return %c0_i32, %c0_i32_0 : i32, i32
  }
  func.func @transform_11(%arg0: i32) -> (i32, i32) {
    %c0_i32 = arith.constant 0 : i32
    %c0_i32_0 = arith.constant 0 : i32
    %c0_i32_1 = arith.constant 0 : i32
    return %c0_i32, %c0_i32_0 : i32, i32
  }
  func.func @transform_12(%arg0: i32) -> (i32, i32) {
    %c0_i32 = arith.constant 0 : i32
    %c0_i32_0 = arith.constant 0 : i32
    %c0_i32_1 = arith.constant 0 : i32
    return %c0_i32, %c0_i32_0 : i32, i32
  }
  func.func @transform_13(%arg0: i32) -> (i32, i32) {
    %c0_i32 = arith.constant 0 : i32
    %c0_i32_0 = arith.constant 0 : i32
    %c0_i32_1 = arith.constant 0 : i32
    return %c0_i32, %c0_i32_0 : i32, i32
  }
  func.func @transform_14(%arg0: i32) -> (i32, i32) {
    %c0_i32 = arith.constant 0 : i32
    %c0_i32_0 = arith.constant 0 : i32
    %c0_i32_1 = arith.constant 0 : i32
    return %c0_i32, %c0_i32_0 : i32, i32
  }
}

module attributes {stable_mosaic.version = 11 : i64} {
  func.func @_mlm_head_kernel(%arg0: i32, %arg1: memref<16x32xf32, #tpu.memory_space<vmem>>, %arg2: memref<32x32xf32, #tpu.memory_space<vmem>>, %arg3: memref<1x32xf32, #tpu.memory_space<vmem>>, %arg4: memref<1x32xf32, #tpu.memory_space<vmem>>, %arg5: memref<1x32xf32, #tpu.memory_space<vmem>>, %arg6: memref<128x32xf32, #tpu.memory_space<vmem>>, %arg7: memref<1x128xf32, #tpu.memory_space<vmem>>, %arg8: memref<16x1xi32, #tpu.memory_space<vmem>>, %arg9: memref<16x128xf32, #tpu.memory_space<vmem>>, %arg10: memref<1x1xf32, #tpu.memory_space<vmem>>) attributes {dimension_semantics = [#tpu.dimension_semantics<arbitrary>], iteration_bounds = array<i64: 1>, scalar_prefetch = 0 : i64, scratch_operands = 0 : i64, tpu.core_type = #tpu.core_type<tc>, window_params = [{pipeline_mode = #tpu.pipeline_mode<synchronous>, transform_indices = @transform_0, window_bounds = array<i64: 16, 32>}, {pipeline_mode = #tpu.pipeline_mode<synchronous>, transform_indices = @transform_1, window_bounds = array<i64: 32, 32>}, {pipeline_mode = #tpu.pipeline_mode<synchronous>, transform_indices = @transform_2, window_bounds = array<i64: 1, 32>}, {pipeline_mode = #tpu.pipeline_mode<synchronous>, transform_indices = @transform_3, window_bounds = array<i64: 1, 32>}, {pipeline_mode = #tpu.pipeline_mode<synchronous>, transform_indices = @transform_4, window_bounds = array<i64: 1, 32>}, {pipeline_mode = #tpu.pipeline_mode<synchronous>, transform_indices = @transform_5, window_bounds = array<i64: 128, 32>}, {pipeline_mode = #tpu.pipeline_mode<synchronous>, transform_indices = @transform_6, window_bounds = array<i64: 1, 128>}, {pipeline_mode = #tpu.pipeline_mode<synchronous>, transform_indices = @transform_7, window_bounds = array<i64: 16, 1>}, {pipeline_mode = #tpu.pipeline_mode<synchronous>, transform_indices = @transform_8, window_bounds = array<i64: 16, 128>}, {pipeline_mode = #tpu.pipeline_mode<synchronous>, transform_indices = @transform_9, window_bounds = array<i64: 1, 1>}]} {
    %c0 = arith.constant 0 : index
    %c0_0 = arith.constant 0 : index
    %0 = vector.load %arg1[%c0, %c0_0] : memref<16x32xf32, #tpu.memory_space<vmem>>, vector<16x32xf32>
    %c0_1 = arith.constant 0 : index
    %c0_2 = arith.constant 0 : index
    %1 = vector.load %arg2[%c0_1, %c0_2] : memref<32x32xf32, #tpu.memory_space<vmem>>, vector<32x32xf32>
    %2 = arith.truncf %0 : vector<16x32xf32> to vector<16x32xbf16>
    %3 = arith.truncf %1 : vector<32x32xf32> to vector<32x32xbf16>
    %cst = arith.constant dense<0.000000e+00> : vector<16x32xf32>
    %4 = tpu.matmul %2, %3, %cst {dimension_numbers = #tpu.dot_dimension_numbers<[1], [0], [0], [1], [0, 0, 1, 1], [], []>} : vector<16x32xbf16>, vector<32x32xbf16>, vector<16x32xf32> -> vector<16x32xf32>
    %c0_3 = arith.constant 0 : index
    %c0_4 = arith.constant 0 : index
    %5 = vector.load %arg3[%c0_3, %c0_4] : memref<1x32xf32, #tpu.memory_space<vmem>>, vector<1x32xf32>
    %6 = vector.broadcast %5 : vector<1x32xf32> to vector<16x32xf32>
    %7 = arith.addf %4, %6 : vector<16x32xf32>
    %cst_5 = arith.constant 5.000000e-01 : f32
    %8 = vector.broadcast %cst_5 : f32 to vector<16x32xf32>
    %9 = arith.mulf %8, %7 : vector<16x32xf32>
    %cst_6 = arith.constant 4.471500e-02 : f32
    %10 = vector.broadcast %cst_6 : f32 to vector<16x32xf32>
    %11 = arith.mulf %10, %7 : vector<16x32xf32>
    %12 = arith.mulf %11, %7 : vector<16x32xf32>
    %13 = arith.mulf %12, %7 : vector<16x32xf32>
    %14 = arith.addf %7, %13 : vector<16x32xf32>
    %cst_7 = arith.constant 0.797884583 : f32
    %15 = vector.broadcast %cst_7 : f32 to vector<16x32xf32>
    %16 = arith.mulf %15, %14 : vector<16x32xf32>
    %17 = math.tanh %16 : vector<16x32xf32>
    %cst_8 = arith.constant 1.000000e+00 : f32
    %18 = vector.broadcast %cst_8 : f32 to vector<16x32xf32>
    %19 = arith.addf %18, %17 : vector<16x32xf32>
    %20 = arith.mulf %9, %19 : vector<16x32xf32>
    %c0_9 = arith.constant 0 : index
    %c0_10 = arith.constant 0 : index
    %21 = vector.load %arg4[%c0_9, %c0_10] : memref<1x32xf32, #tpu.memory_space<vmem>>, vector<1x32xf32>
    %c0_11 = arith.constant 0 : index
    %c0_12 = arith.constant 0 : index
    %22 = vector.load %arg5[%c0_11, %c0_12] : memref<1x32xf32, #tpu.memory_space<vmem>>, vector<1x32xf32>
    %cst_13 = arith.constant dense<0.000000e+00> : vector<16xf32>
    %23 = vector.multi_reduction <add>, %20, %cst_13 [1] : vector<16x32xf32> to vector<16xf32>
    %24 = vector.shape_cast %23 : vector<16xf32> to vector<16x1xf32>
    %cst_14 = arith.constant 3.200000e+01 : f32
    %25 = vector.broadcast %cst_14 : f32 to vector<16x1xf32>
    %26 = arith.divf %24, %25 : vector<16x1xf32>
    %27 = vector.broadcast %26 : vector<16x1xf32> to vector<16x32xf32>
    %28 = arith.subf %20, %27 : vector<16x32xf32>
    %29 = arith.mulf %28, %28 : vector<16x32xf32>
    %cst_15 = arith.constant dense<0.000000e+00> : vector<16xf32>
    %30 = vector.multi_reduction <add>, %29, %cst_15 [1] : vector<16x32xf32> to vector<16xf32>
    %31 = vector.shape_cast %30 : vector<16xf32> to vector<16x1xf32>
    %cst_16 = arith.constant 3.200000e+01 : f32
    %32 = vector.broadcast %cst_16 : f32 to vector<16x1xf32>
    %33 = arith.divf %31, %32 : vector<16x1xf32>
    %cst_17 = arith.constant 9.99999996E-13 : f32
    %34 = vector.broadcast %cst_17 : f32 to vector<16x1xf32>
    %35 = arith.addf %33, %34 : vector<16x1xf32>
    %36 = math.rsqrt %35 : vector<16x1xf32>
    %37 = vector.broadcast %36 : vector<16x1xf32> to vector<16x32xf32>
    %38 = arith.mulf %28, %37 : vector<16x32xf32>
    %39 = vector.broadcast %21 : vector<1x32xf32> to vector<16x32xf32>
    %40 = arith.mulf %38, %39 : vector<16x32xf32>
    %41 = vector.broadcast %22 : vector<1x32xf32> to vector<16x32xf32>
    %42 = arith.addf %40, %41 : vector<16x32xf32>
    %c0_18 = arith.constant 0 : index
    %c0_19 = arith.constant 0 : index
    %43 = vector.load %arg6[%c0_18, %c0_19] : memref<128x32xf32, #tpu.memory_space<vmem>>, vector<128x32xf32>
    %44 = arith.truncf %42 : vector<16x32xf32> to vector<16x32xbf16>
    %45 = arith.truncf %43 : vector<128x32xf32> to vector<128x32xbf16>
    %cst_20 = arith.constant dense<0.000000e+00> : vector<16x128xf32>
    %46 = tpu.matmul %44, %45, %cst_20 {dimension_numbers = #tpu.dot_dimension_numbers<[1], [1], [0], [0], [0, 0, 1, 0], [], []>} : vector<16x32xbf16>, vector<128x32xbf16>, vector<16x128xf32> -> vector<16x128xf32>
    %c0_21 = arith.constant 0 : index
    %c0_22 = arith.constant 0 : index
    %47 = vector.load %arg7[%c0_21, %c0_22] : memref<1x128xf32, #tpu.memory_space<vmem>>, vector<1x128xf32>
    %48 = vector.broadcast %47 : vector<1x128xf32> to vector<16x128xf32>
    %49 = arith.addf %46, %48 : vector<16x128xf32>
    %c0_23 = arith.constant 0 : index
    %c0_24 = arith.constant 0 : index
    %50 = vector.load %arg9[%c0_23, %c0_24] : memref<16x128xf32, #tpu.memory_space<vmem>>, vector<16x128xf32>
    tpu.vector_store %arg9[%c0_23, %c0_24], %49 {strides = array<i32>} : memref<16x128xf32, #tpu.memory_space<vmem>>, vector<16x128xf32>,
    %c0_25 = arith.constant 0 : index
    %c0_26 = arith.constant 0 : index
    %51 = vector.load %arg8[%c0_25, %c0_26] : memref<16x1xi32, #tpu.memory_space<vmem>>, vector<16x1xi32>
    %cst_27 = arith.constant dense<0xFF800000> : vector<16xf32>
    %52 = vector.multi_reduction <maximumf>, %49, %cst_27 [1] : vector<16x128xf32> to vector<16xf32>
    %53 = vector.shape_cast %52 : vector<16xf32> to vector<16x1xf32>
    %54 = vector.broadcast %53 : vector<16x1xf32> to vector<16x128xf32>
    %55 = arith.subf %49, %54 : vector<16x128xf32>
    %56 = math.exp %55 : vector<16x128xf32>
    %cst_28 = arith.constant dense<0.000000e+00> : vector<16xf32>
    %57 = vector.multi_reduction <add>, %56, %cst_28 [1] : vector<16x128xf32> to vector<16xf32>
    %58 = vector.shape_cast %57 : vector<16xf32> to vector<16x1xf32>
    %59 = math.log %58 : vector<16x1xf32>
    %60 = arith.addf %53, %59 : vector<16x1xf32>
    %61 = tpu.iota {dimensions = array<i32: 1>} : vector<16x128xi32>
    %62 = vector.broadcast %51 : vector<16x1xi32> to vector<16x128xi32>
    %63 = arith.cmpi eq, %61, %62 : vector<16x128xi32>
    %cst_29 = arith.constant 0.000000e+00 : f32
    %64 = vector.broadcast %cst_29 : f32 to vector<16x128xf32>
    %65 = arith.select %63, %49, %64 : vector<16x128xi1>, vector<16x128xf32>
    %cst_30 = arith.constant dense<0.000000e+00> : vector<16xf32>
    %66 = vector.multi_reduction <add>, %65, %cst_30 [1] : vector<16x128xf32> to vector<16xf32>
    %67 = vector.shape_cast %66 : vector<16xf32> to vector<16x1xf32>
    %c-100_i32 = arith.constant -100 : i32
    %68 = vector.broadcast %c-100_i32 : i32 to vector<16x1xi32>
    %69 = arith.cmpi ne, %51, %68 : vector<16x1xi32>
    %70 = arith.extui %69 : vector<16x1xi1> to vector<16x1xi32>
    %71 = arith.sitofp %70 : vector<16x1xi32> to vector<16x1xf32>
    %72 = arith.subf %60, %67 : vector<16x1xf32>
    %73 = arith.mulf %72, %71 : vector<16x1xf32>
    %74 = vector.shape_cast %71 : vector<16x1xf32> to vector<1x16x1xf32>
    %cst_31 = arith.constant dense<0.000000e+00> : vector<1xf32>
    %75 = vector.multi_reduction <add>, %74, %cst_31 [1, 2] : vector<1x16x1xf32> to vector<1xf32>
    %76 = vector.shape_cast %75 : vector<1xf32> to vector<1x1x1xf32>
    %77 = vector.extract %76[0, 0, 0] : f32 from vector<1x1x1xf32>
    %cst_32 = arith.constant 1.000000e+00 : f32
    %78 = arith.maximumf %77, %cst_32 : f32
    %79 = vector.shape_cast %73 : vector<16x1xf32> to vector<1x16x1xf32>
    %cst_33 = arith.constant dense<0.000000e+00> : vector<1xf32>
    %80 = vector.multi_reduction <add>, %79, %cst_33 [1, 2] : vector<1x16x1xf32> to vector<1xf32>
    %81 = vector.shape_cast %80 : vector<1xf32> to vector<1x1x1xf32>
    %82 = vector.extract %81[0, 0, 0] : f32 from vector<1x1x1xf32>
    %83 = arith.divf %82, %78 : f32
    %84 = vector.broadcast %83 : f32 to vector<1x1xf32>
    %c0_34 = arith.constant 0 : index
    %c0_35 = arith.constant 0 : index
    %85 = vector.load %arg10[%c0_34, %c0_35] : memref<1x1xf32, #tpu.memory_space<vmem>>, vector<1x1xf32>
    tpu.vector_store %arg10[%c0_34, %c0_35], %84 {strides = array<i32>} : memref<1x1xf32, #tpu.memory_space<vmem>>, vector<1x1xf32>,
    return
  }
  func.func @transform_0(%arg0: i32) -> (i32, i32) {
    %c0_i32 = arith.constant 0 : i32
    %c0_i32_0 = arith.constant 0 : i32
    %c0_i32_1 = arith.constant 0 : i32
    return %c0_i32, %c0_i32_0 : i32, i32
  }
  func.func @transform_1(%arg0: i32) -> (i32, i32) {
    %c0_i32 = arith.constant 0 : i32
    %c0_i32_0 = arith.constant 0 : i32
    %c0_i32_1 = arith.constant 0 : i32
    return %c0_i32, %c0_i32_0 : i32, i32
  }
  func.func @transform_2(%arg0: i32) -> (i32, i32) {
    %c0_i32 = arith.constant 0 : i32
    %c0_i32_0 = arith.constant 0 : i32
    %c0_i32_1 = arith.constant 0 : i32
    return %c0_i32, %c0_i32_0 : i32, i32
  }
  func.func @transform_3(%arg0: i32) -> (i32, i32) {
    %c0_i32 = arith.constant 0 : i32
    %c0_i32_0 = arith.constant 0 : i32
    %c0_i32_1 = arith.constant 0 : i32
    return %c0_i32, %c0_i32_0 : i32, i32
  }
  func.func @transform_4(%arg0: i32) -> (i32, i32) {
    %c0_i32 = arith.constant 0 : i32
    %c0_i32_0 = arith.constant 0 : i32
    %c0_i32_1 = arith.constant 0 : i32
    return %c0_i32, %c0_i32_0 : i32, i32
  }
  func.func @transform_5(%arg0: i32) -> (i32, i32) {
    %c0_i32 = arith.constant 0 : i32
    %c0_i32_0 = arith.constant 0 : i32
    %c0_i32_1 = arith.constant 0 : i32
    return %c0_i32, %c0_i32_0 : i32, i32
  }
  func.func @transform_6(%arg0: i32) -> (i32, i32) {
    %c0_i32 = arith.constant 0 : i32
    %c0_i32_0 = arith.constant 0 : i32
    %c0_i32_1 = arith.constant 0 : i32
    return %c0_i32, %c0_i32_0 : i32, i32
  }
  func.func @transform_7(%arg0: i32) -> (i32, i32) {
    %c0_i32 = arith.constant 0 : i32
    %c0_i32_0 = arith.constant 0 : i32
    %c0_i32_1 = arith.constant 0 : i32
    return %c0_i32, %c0_i32_0 : i32, i32
  }
  func.func @transform_8(%arg0: i32) -> (i32, i32) {
    %c0_i32 = arith.constant 0 : i32
    %c0_i32_0 = arith.constant 0 : i32
    %c0_i32_1 = arith.constant 0 : i32
    return %c0_i32, %c0_i32_0 : i32, i32
  }
  func.func @transform_9(%arg0: i32) -> (i32, i32) {
    %c0_i32 = arith.constant 0 : i32
    %c0_i32_0 = arith.constant 0 : i32
    %c0_i32_1 = arith.constant 0 : i32
    return %c0_i32, %c0_i32_0 : i32, i32
  }
}

</mosaic_0001>

<llo_original>
// kernel: mlm_forward.4
$region0: #{mlm_forward.4}
  #allocation0 [shape = 'u32[]', space=smem, size = 0x4, offset = 0x4, fixed_abs, tag = 'smem constant byte address 0x4 - core index']
  #allocation1 [shape = 'u32[144,128]{1,0:T(1,128)}', space=vmem, size = 0x12000, scoped, tag = 'internal scratch']
  %s0 = inlined_call_operand.vmem [shape: f32[16,32], index: 0, kind: input, shape index: {}]
  %s1 = inlined_call_operand.vmem [shape: f32[1,32], index: 1, kind: input, shape index: {}]
  %s2 = inlined_call_operand.vmem [shape: f32[1,32], index: 2, kind: input, shape index: {}]
  %s3 = inlined_call_operand.vmem [shape: f32[16,32], index: 3, kind: output, shape index: {}]
  %s4 = sld [smem:[#allocation0]]
  $region22: #{mlm_forward.4} parent=0
    _
  %s6 = ssub.s32 1, %s4
  %s7 = scalar_select 0, %s6, %s4
  // Predicated region
  $region2: #{mlm_forward.4} parent=0 // pred_check
    _
  $region3: #{mlm_forward.4} parent=0 // pred_check_branch
    %9 = sbr.rel (0) target = $region5
  $region4: #{mlm_forward.4} parent=0 // pred_region
    _
  $region5: #{mlm_forward.4} parent=0 // pred_fallthru
    _
  // Predicated region
  $region6: #{mlm_forward.4} parent=0 // pred_check
    _
  $region7: #{mlm_forward.4} parent=0 // pred_check_branch
    %11 = sbr.rel (0) target = $region9
  $region8: #{mlm_forward.4} parent=0 // pred_region
    _
  $region9: #{mlm_forward.4} parent=0 // pred_fallthru
    _
  // Predicated region
  $region10: #{mlm_forward.4} parent=0 // pred_check
    _
  $region11: #{mlm_forward.4} parent=0 // pred_check_branch
    %13 = sbr.rel (0) target = $region13
  $region12: #{mlm_forward.4} parent=0 // pred_region
    _
  $region13: #{mlm_forward.4} parent=0 // pred_fallthru
    _
  %v14 = vld [vmem:[%s0] sm:$0xff]
  %v15 = vld [vmem:[%s0 + $0x8] sm:$0xff]
  %v16 = vld [vmem:[%s1] sm:$0x1]
  %v17 = vld [vmem:[%s2] sm:$0x1]
  %vm18 = vcmask 261120
  %v19 = vsel %vm18, %v14, 0.0
  %20 = vadd.xlane.f32.xlu0 %v19
  %v21 = vpop.xlane.xlu0 %20
  %v22 = vsel %vm18, %v15, 0.0
  %23 = vadd.xlane.f32.xlu0 %v22
  %v24 = vpop.xlane.xlu0 %23
  %v25 = vrcp.pop 32.0
  %v26 = vmul.f32 %v21, %v25
  %v27 = vmul.f32 %v24, %v25
  %v28 = vsub.f32 %v14, %v26
  %v29 = vsub.f32 %v15, %v27
  %v30 = vmul.f32 %v28, %v28
  %v31 = vmul.f32 %v29, %v29
  %v32 = vsel %vm18, %v30, 0.0
  %33 = vadd.xlane.f32.xlu0 %v32
  %v34 = vpop.xlane.xlu0 %33
  %v35 = vsel %vm18, %v31, 0.0
  %36 = vadd.xlane.f32.xlu0 %v35
  %v37 = vpop.xlane.xlu0 %36
  %v38 = vmul.f32 %v34, %v25
  %v39 = vmul.f32 %v37, %v25
  %v40 = vadd.f32 %v38, 1e-12
  %v41 = vadd.f32 %v39, 1e-12
  %v42 = vrsqrt.pop %v40
  %v43 = vrsqrt.pop %v41
  %v44 = vmul.f32 %v28, %v42
  %v45 = vmul.f32 %v29, %v43
  %v47 = vlaneseq
  %v48 = vshrl.u32 %v47, 7
  %v49 = vsub.s32 0, %v48
  %v50 = vrot.slane %v16, %v49
  %v52 = vmul.f32 %v44, %v50
  %v53 = vmul.f32 %v45, %v50
  %v55 = vlaneseq
  %v56 = vshrl.u32 %v55, 7
  %v57 = vsub.s32 0, %v56
  %v58 = vrot.slane %v17, %v57
  %v60 = vadd.f32 %v52, %v58
  %v61 = vadd.f32 %v53, %v58
  %62 = vst.msk [vmem:[%s3] sm:$0xff] %vm18, %v60
  %63 = vst.msk [vmem:[%s3 + $0x8] sm:$0xff] %vm18, %v61
  // Predicated region
  $region14: #{mlm_forward.4} parent=0 // pred_check
    _
  $region15: #{mlm_forward.4} parent=0 // pred_check_branch
    %65 = sbr.rel (0) target = $region17
  $region16: #{mlm_forward.4} parent=0 // pred_region
    _
  $region17: #{mlm_forward.4} parent=0 // pred_fallthru
    _
  // Predicated region
  $region18: #{mlm_forward.4} parent=0 // pred_check
    _
  $region19: #{mlm_forward.4} parent=0 // pred_check_branch
    %67 = sbr.rel (0) target = $region21
  $region20: #{mlm_forward.4} parent=0 // pred_region
    _
  $region21: #{mlm_forward.4} parent=0 // pred_fallthru
    _

// kernel: mlm_forward.7
$region0: #{mlm_forward.7}
  #allocation0 [shape = 'u32[]', space=smem, size = 0x4, offset = 0x4, fixed_abs, tag = 'smem constant byte address 0x4 - core index']
  #allocation1 [shape = 'u32[144,128]{1,0:T(1,128)}', space=vmem, size = 0x12000, scoped, tag = 'internal scratch']
  %s0 = inlined_call_operand.vmem [shape: f32[16,32], index: 0, kind: input, shape index: {}]
  %s1 = inlined_call_operand.vmem [shape: f32[32,32], index: 1, kind: input, shape index: {}]
  %s2 = inlined_call_operand.vmem [shape: f32[1,32], index: 2, kind: input, shape index: {}]
  %s3 = inlined_call_operand.vmem [shape: f32[1,32], index: 3, kind: input, shape index: {}]
  %s4 = inlined_call_operand.vmem [shape: f32[1,32], index: 4, kind: input, shape index: {}]
  %s5 = inlined_call_operand.vmem [shape: f32[128,32], index: 5, kind: input, shape index: {}]
  %s6 = inlined_call_operand.vmem [shape: f32[1,128], index: 6, kind: input, shape index: {}]
  %s7 = inlined_call_operand.vmem [shape: s32[16,1], index: 7, kind: input, shape index: {}]
  %s8 = inlined_call_operand.hbm [shape: f32[16,128], index: 8, kind: output, shape index: {0}]
  %s9 = inlined_call_operand.hbm [shape: f32[1,1], index: 9, kind: output, shape index: {1}]
  %10 = xla_tuple %s8, %s9
  %s11 = sld [smem:[#allocation0]]
  $region50: #{mlm_forward.7} parent=0
    _
  %s13 = ssub.s32 1, %s11
  %s14 = scalar_select 0, %s13, %s11
  $region1: #{mlm_forward.7} parent=0
    #allocation2 [shape = 'u8[8192]{0}', space=vmem, size = 0x2000, scoped, tag = 'output window, operand 0, single buffered']
    #allocation3 [shape = 's32[1]{0}', space=sflag, size = 0x4, scoped, tag = 'scoped memory for mlm_forward.7']
    #allocation4 [shape = 'u8[512]{0}', space=vmem, size = 0x400, scoped, tag = 'output window, operand 1, single buffered']
    #allocation5 [shape = 's32[1]{0}', space=sflag, size = 0x4, scoped, tag = 'scoped memory for mlm_forward.7']
    %15 = vsyncpa [#allocation3], 0
    %16 = vsyncpa [#allocation5], 0
    // Predicated region
    $region2: #{mlm_forward.7} parent=1 // pred_check
      _
    $region3: #{mlm_forward.7} parent=1 // pred_check_branch
      %18 = sbr.rel (0) target = $region5
    $region4: #{mlm_forward.7} parent=1 // pred_region
      _
    $region5: #{mlm_forward.7} parent=1 // pred_fallthru
      _
    // Predicated region
    $region6: #{mlm_forward.7} parent=1 // pred_check
      _
    $region7: #{mlm_forward.7} parent=1 // pred_check_branch
      %20 = sbr.rel (0) target = $region9
    $region8: #{mlm_forward.7} parent=1 // pred_region
      _
    $region9: #{mlm_forward.7} parent=1 // pred_fallthru
      _
    // Predicated region
    $region10: #{mlm_forward.7} parent=1 // pred_check
      _
    $region11: #{mlm_forward.7} parent=1 // pred_check_branch
      %22 = sbr.rel (0) target = $region13
    $region12: #{mlm_forward.7} parent=1 // pred_region
      _
    $region13: #{mlm_forward.7} parent=1 // pred_fallthru
      _
    // Predicated region
    $region14: #{mlm_forward.7} parent=1 // pred_check
      _
    $region15: #{mlm_forward.7} parent=1 // pred_check_branch
      %24 = sbr.rel (0) target = $region17
    $region16: #{mlm_forward.7} parent=1 // pred_region
      _
    $region17: #{mlm_forward.7} parent=1 // pred_fallthru
      _
    // Predicated region
    $region18: #{mlm_forward.7} parent=1 // pred_check
      _
    $region19: #{mlm_forward.7} parent=1 // pred_check_branch
      %26 = sbr.rel (0) target = $region21
    $region20: #{mlm_forward.7} parent=1 // pred_region
      _
    $region21: #{mlm_forward.7} parent=1 // pred_fallthru
      _
    // Predicated region
    $region22: #{mlm_forward.7} parent=1 // pred_check
      _
    $region23: #{mlm_forward.7} parent=1 // pred_check_branch
      %28 = sbr.rel (0) target = $region25
    $region24: #{mlm_forward.7} parent=1 // pred_region
      _
    $region25: #{mlm_forward.7} parent=1 // pred_fallthru
      _
    // Predicated region
    $region26: #{mlm_forward.7} parent=1 // pred_check
      _
    $region27: #{mlm_forward.7} parent=1 // pred_check_branch
      %30 = sbr.rel (0) target = $region29
    $region28: #{mlm_forward.7} parent=1 // pred_region
      _
    $region29: #{mlm_forward.7} parent=1 // pred_fallthru
      _
    // Predicated region
    $region30: #{mlm_forward.7} parent=1 // pred_check
      _
    $region31: #{mlm_forward.7} parent=1 // pred_check_branch
      %32 = sbr.rel (0) target = $region33
    $region32: #{mlm_forward.7} parent=1 // pred_region
      _
    $region33: #{mlm_forward.7} parent=1 // pred_fallthru
      _
    %v34 = vld [vmem:[%s0] sm:$0xff]
    %v35 = vld [vmem:[%s0 + $0x8] sm:$0xff]
    %v36 = vld [vmem:[%s1] sm:$0xff]
    %v37 = vld [vmem:[%s1 + $0x8] sm:$0xff]
    %v38 = vld [vmem:[%s1 + $0x10] sm:$0xff]
    %v39 = vld [vmem:[%s1 + $0x18] sm:$0xff]
    %v40 = vpack.c.bf16 %v35, %v34
    %v41 = vpack.c.bf16 %v37, %v36
    %v42 = vpack.c.bf16 %v39, %v38
    %v43 = vld [vmem:[%s2] sm:$0x1]
    %v45 = vlaneseq
    %v46 = vshrl.u32 %v45, 7
    %v47 = vsub.s32 0, %v46
    %v48 = vrot.slane %v43, %v47
    %vm50 = vcmask 261120
    %v52 = vsel %vm50, %v40, 0
    %54 = vmatprep.subr.bf16.mxu0 0
    %55 = vmatpush1.bf16.msra.mxu0 %v41
    %56 = vmatprep.subr.bf16.mxu0 0
    %57 = vmatpush1.bf16.msra.mxu0 %v42
    %58 = vmatprep.subr.bf16.mxu0 0
    %59 = vmatpush1.bf16.msra.mxu0 0
    %60 = vmatprep.subr.bf16.mxu0 0
    %61 = vmatpush1.bf16.msra.mxu0 0
    %62 = vmatprep.subr.bf16.mxu0 0
    %63 = vmatpush1.bf16.msra.mxu0 0
    %64 = vmatprep.subr.bf16.mxu0 0
    %65 = vmatpush1.bf16.msra.mxu0 0
    %66 = vmatprep.subr.bf16.mxu0 0
    %67 = vmatpush1.bf16.msra.mxu0 0
    %68 = vmatprep.subr.bf16.mxu0 0
    %69 = vmatpush1.bf16.msra.mxu0 0
    %70 = vmatprep.subr.bf16.mxu0 0
    %71 = vmatpush1.bf16.msra.mxu0 0
    %72 = vmatprep.subr.bf16.mxu0 0
    %73 = vmatpush1.bf16.msra.mxu0 0
    %74 = vmatprep.subr.bf16.mxu0 0
    %75 = vmatpush1.bf16.msra.mxu0 0
    %76 = vmatprep.subr.bf16.mxu0 0
    %77 = vmatpush1.bf16.msra.mxu0 0
    %78 = vmatprep.subr.bf16.mxu0 0
    %79 = vmatpush1.bf16.msra.mxu0 0
    %80 = vmatprep.subr.bf16.mxu0 0
    %81 = vmatpush1.bf16.msra.mxu0 0
    %82 = vmatprep.subr.bf16.mxu0 0
    %83 = vmatpush1.bf16.msra.mxu0 0
    %84 = vmatprep.subr.bf16.mxu0 0
    %85 = vmatpush1.bf16.msra.mxu0 0
    %86 = vmatprep.mubr.bf16.mxu0 0
    %87 = vmatmul.mubr.bf16.gmra.mrb[0].mxu0 %v52
    %v88 = vpop.f32.mrb[0].mxu0
    %v89 = vadd.f32 %v48, %v88
    %v90 = vpop.f32.mrb[0].mxu0
    %v91 = vpop.f32.mrb[0].mxu0
    %v92 = vadd.f32 %v48, %v91
    %v93 = vpop.f32.mrb[0].mxu0
    %94 = vdwg.mxu0
    %v95 = vmul.f32 %v89, 0.5
    %v96 = vmul.f32 %v92, 0.5
    %v97 = vmul.f32 %v89, 0.044715
    %v98 = vmul.f32 %v92, 0.044715
    %v99 = vmul.f32 %v97, %v89
    %v100 = vmul.f32 %v98, %v92
    %v101 = vmul.f32 %v99, %v89
    %v102 = vmul.f32 %v100, %v92
    %v103 = vadd.f32 %v89, %v101
    %v104 = vadd.f32 %v92, %v102
    %v105 = vmul.f32 %v103, 0.7978846
    %v106 = vmul.f32 %v104, 0.7978846
    %v107 = vtanh.pop %v105
    %v108 = vtanh.pop %v106
    %v109 = vadd.f32 %v107, 1.0
    %v110 = vadd.f32 %v108, 1.0
    %v111 = vmul.f32 %v95, %v109
    %v112 = vmul.f32 %v96, %v110
    %v113 = vld [vmem:[%s3] sm:$0x1]
    %v114 = vld [vmem:[%s4] sm:$0x1]
    %v115 = vsel %vm50, %v111, 0.0
    %116 = vadd.xlane.f32.xlu0 %v115
    %v117 = vpop.xlane.xlu0 %116
    %v118 = vsel %vm50, %v112, 0.0
    %119 = vadd.xlane.f32.xlu0 %v118
    %v120 = vpop.xlane.xlu0 %119
    %v121 = vrcp.pop 32.0
    %v122 = vmul.f32 %v117, %v121
    %v123 = vmul.f32 %v120, %v121
    %v124 = vsub.f32 %v111, %v122
    %v125 = vsub.f32 %v112, %v123
    %v126 = vmul.f32 %v124, %v124
    %v127 = vmul.f32 %v125, %v125
    %v128 = vsel %vm50, %v126, 0.0
    %129 = vadd.xlane.f32.xlu0 %v128
    %v130 = vpop.xlane.xlu0 %129
    %v131 = vsel %vm50, %v127, 0.0
    %132 = vadd.xlane.f32.xlu0 %v131
    %v133 = vpop.xlane.xlu0 %132
    %v134 = vmul.f32 %v130, %v121
    %v135 = vmul.f32 %v133, %v121
    %v136 = vadd.f32 %v134, 1e-12
    %v137 = vadd.f32 %v135, 1e-12
    %v138 = vrsqrt.pop %v136
    %v139 = vrsqrt.pop %v137
    %v140 = vmul.f32 %v124, %v138
    %v141 = vmul.f32 %v125, %v139
    %v143 = vlaneseq
    %v144 = vshrl.u32 %v143, 7
    %v145 = vsub.s32 0, %v144
    %v146 = vrot.slane %v113, %v145
    %v148 = vmul.f32 %v140, %v146
    %v149 = vmul.f32 %v141, %v146
    %v151 = vlaneseq
    %v152 = vshrl.u32 %v151, 7
    %v153 = vsub.s32 0, %v152
    %v154 = vrot.slane %v114, %v153
    %v156 = vadd.f32 %v148, %v154
    %v157 = vadd.f32 %v149, %v154
    %v158 = vld [vmem:[%s5] sm:$0xff]
    %v159 = vld [vmem:[%s5 + $0x8] sm:$0xff]
    %v160 = vld [vmem:[%s5 + $0x10] sm:$0xff]
    %v161 = vld [vmem:[%s5 + $0x18] sm:$0xff]
    %v162 = vld [vmem:[%s5 + $0x20] sm:$0xff]
    %v163 = vld [vmem:[%s5 + $0x28] sm:$0xff]
    %v164 = vld [vmem:[%s5 + $0x30] sm:$0xff]
    %v165 = vld [vmem:[%s5 + $0x38] sm:$0xff]
    %v166 = vld [vmem:[%s5 + $0x40] sm:$0xff]
    %v167 = vld [vmem:[%s5 + $0x48] sm:$0xff]
    %v168 = vld [vmem:[%s5 + $0x50] sm:$0xff]
    %v169 = vld [vmem:[%s5 + $0x58] sm:$0xff]
    %v170 = vld [vmem:[%s5 + $0x60] sm:$0xff]
    %v171 = vld [vmem:[%s5 + $0x68] sm:$0xff]
    %v172 = vld [vmem:[%s5 + $0x70] sm:$0xff]
    %v173 = vld [vmem:[%s5 + $0x78] sm:$0xff]
    %v174 = vpack.c.bf16 %v157, %v156
    %v175 = vpack.c.bf16 %v159, %v158
    %v176 = vpack.c.bf16 %v161, %v160
    %v177 = vpack.c.bf16 %v163, %v162
    %v178 = vpack.c.bf16 %v165, %v164
    %v179 = vpack.c.bf16 %v167, %v166
    %v180 = vpack.c.bf16 %v169, %v168
    %v181 = vpack.c.bf16 %v171, %v170
    %v182 = vpack.c.bf16 %v173, %v172
    %v183 = vld [vmem:[%s6] sm:$0x1]
    %v185 = vlaneseq
    %v186 = vshrl.u32 %v185, 7
    %v187 = vsub.s32 0, %v186
    %v188 = vrot.slane %v183, %v187
    %v191 = vsel %vm50, %v174, 0
    %v194 = vsel %vm50, %v175, 0
    %v197 = vsel %vm50, %v176, 0
    %v200 = vsel %vm50, %v177, 0
    %v203 = vsel %vm50, %v178, 0
    %v206 = vsel %vm50, %v179, 0
    %v209 = vsel %vm50, %v180, 0
    %v212 = vsel %vm50, %v181, 0
    %v215 = vsel %vm50, %v182, 0
    %217 = vmatprep.subr.bf16.mxu0 0
    %218 = vmatpush1.bf16.xpose.msra.mxu0 %v194
    %219 = vmatprep.subr.bf16.mxu0 0
    %220 = vmatpush1.bf16.xpose.msra.mxu0 %v197
    %221 = vmatprep.subr.bf16.mxu0 0
    %222 = vmatpush1.bf16.xpose.msra.mxu0 %v200
    %223 = vmatprep.subr.bf16.mxu0 0
    %224 = vmatpush1.bf16.xpose.msra.mxu0 %v203
    %225 = vmatprep.subr.bf16.mxu0 0
    %226 = vmatpush1.bf16.xpose.msra.mxu0 %v206
    %227 = vmatprep.subr.bf16.mxu0 0
    %228 = vmatpush1.bf16.xpose.msra.mxu0 %v209
    %229 = vmatprep.subr.bf16.mxu0 0
    %230 = vmatpush1.bf16.xpose.msra.mxu0 %v212
    %231 = vmatprep.subr.bf16.mxu0 0
    %232 = vmatpush1.bf16.xpose.msra.mxu0 %v215
    %233 = vmatprep.subr.bf16.mxu0 0
    %234 = vmatpush1.bf16.xpose.msra.mxu0 0
    %235 = vmatprep.subr.bf16.mxu0 0
    %236 = vmatpush1.bf16.xpose.msra.mxu0 0
    %237 = vmatprep.subr.bf16.mxu0 0
    %238 = vmatpush1.bf16.xpose.msra.mxu0 0
    %239 = vmatprep.subr.bf16.mxu0 0
    %240 = vmatpush1.bf16.xpose.msra.mxu0 0
    %241 = vmatprep.subr.bf16.mxu0 0
    %242 = vmatpush1.bf16.xpose.msra.mxu0 0
    %243 = vmatprep.subr.bf16.mxu0 0
    %244 = vmatpush1.bf16.xpose.msra.mxu0 0
    %245 = vmatprep.subr.bf16.mxu0 0
    %246 = vmatpush1.bf16.xpose.msra.mxu0 0
    %247 = vmatprep.subr.bf16.mxu0 0
    %248 = vmatpush1.bf16.xpose.msra.mxu0 0
    %249 = vmatprep.mubr.bf16.mxu0 0
    %250 = vmatmul.mubr.bf16.gmra.mrb[0].mxu0 %v191
    %v251 = vpop.f32.mrb[0].mxu0
    %v252 = vadd.f32 %v188, %v251
    %v253 = vpop.f32.mrb[0].mxu0
    %v254 = vpop.f32.mrb[0].mxu0
    %v255 = vadd.f32 %v188, %v254
    %v256 = vpop.f32.mrb[0].mxu0
    %257 = vdwg.mxu0
    %258 = vst [vmem:[#allocation2] sm:$0xff] %v252
    %259 = vst [vmem:[#allocation2 + $0x8] sm:$0xff] %v255
    %v260 = vld [vmem:[%s7] sm:$0xff]
    %v261 = vld [vmem:[%s7 + $0x8] sm:$0xff]
    %262 = vmax.xlane.f32.xlu0 %v252
    %v263 = vpop.xlane.xlu0 %262
    %264 = vmax.xlane.f32.xlu0 %v255
    %v265 = vpop.xlane.xlu0 %264
    %v266 = vsub.f32 %v252, %v263
    %v267 = vsub.f32 %v255, %v265
    %v268 = vmul.f32 %v266, 1.442695
    %v269 = vpow.pop %v268
    %v270 = vmul.f32 %v267, 1.442695
    %v271 = vpow.pop %v270
    %272 = vadd.xlane.f32.xlu0 %v269
    %v273 = vpop.xlane.xlu0 %272
    %274 = vadd.xlane.f32.xlu0 %v271
    %v275 = vpop.xlane.xlu0 %274
    %v276 = vlog2.pop %v273
    %v277 = vmul.f32 %v276, 0.6931472
    %v278 = vlog2.pop %v275
    %v279 = vmul.f32 %v278, 0.6931472
    %v280 = vadd.f32 %v263, %v277
    %v281 = vadd.f32 %v265, %v279
    %v282 = vlaneseq
    %v283 = vand.u32 %v282, 127
    %284 = vset.pattern.permute.xlu0 0
    %285 = vperm.xlu0 %284, %v260
    %v286 = vpop.permute.xlu0 %285
    %287 = vset.pattern.permute.xlu0 0
    %288 = vperm.xlu0 %287, %v261
    %v289 = vpop.permute.xlu0 %288
    %vm290 = vcmp.eq.s32.totalorder %v283, %v286
    %vm291 = vcmp.eq.s32.totalorder %v283, %v289
    %v292 = vsel %vm290, %v252, 0.0
    %v293 = vsel %vm291, %v255, 0.0
    %294 = vadd.xlane.f32.xlu0 %v292
    %v295 = vpop.xlane.xlu0 %294
    %296 = vadd.xlane.f32.xlu0 %v293
    %v297 = vpop.xlane.xlu0 %296
    %vm298 = vcmp.ne.s32.totalorder %v260, 4294967196
    %vm299 = vcmp.ne.s32.totalorder %v261, 4294967196
    %v300 = vsel %vm298, 1, 0
    %v301 = vsel %vm299, 1, 0
    %v302 = vcvt.s32.f32 %v300
    %v303 = vcvt.s32.f32 %v301
    %v304 = vsub.f32 %v280, %v295
    %v305 = vsub.f32 %v281, %v297
    %v306 = vmul.f32 %v304, %v302
    %v307 = vmul.f32 %v305, %v303
    %vm308 = vcmask 7168
    %v309 = vsel %vm308, %v302, 0.0
    %v310 = vsel %vm308, %v303, 0.0
    %v311 = vadd.f32 %v309, %v310
    %312 = vadd.xlane.f32.xlu0 %v311
    %v313 = vpop.xlane.xlu0 %312
    %v314 = vrot.slane %v313, 4
    %v315 = vadd.f32 %v313, %v314
    %v316 = vrot.slane %v315, 2
    %v317 = vadd.f32 %v315, %v316
    %v318 = vrot.slane %v317, 1
    %v319 = vadd.f32 %v317, %v318
    %s320 = vtos %v319
    %s321 = smax.f32 %s320, 1.0
    %v322 = vsel %vm308, %v306, 0.0
    %v323 = vsel %vm308, %v307, 0.0
    %v324 = vadd.f32 %v322, %v323
    %325 = vadd.xlane.f32.xlu0 %v324
    %v326 = vpop.xlane.xlu0 %325
    %v327 = vrot.slane %v326, 4
    %v328 = vadd.f32 %v326, %v327
    %v329 = vrot.slane %v328, 2
    %v330 = vadd.f32 %v328, %v329
    %v331 = vrot.slane %v330, 1
    %v332 = vadd.f32 %v330, %v331
    %s333 = vtos %v332
    %v334 = vstv %s321
    %v335 = vrcp.pop %v334
    %s336 = vtos %v335
    %s337 = smul.f32 %s333, %s336
    %v338 = vstv %s337
    %vm339 = vcmask 0
    %340 = vst.msk [vmem:[#allocation4] sm:$0x1] %vm339, %v338
    // Predicated region
    $region34: #{mlm_forward.7} parent=1 // pred_check
      _
    $region35: #{mlm_forward.7} parent=1 // pred_check_branch
      %342 = sbr.rel (0) target = $region37
    $region36: #{mlm_forward.7} parent=1 // pred_region
      %s344 = ssub.s32 256, 256
      %345 = vsyncadd [#allocation3], %s344
      %s346 = sshll.u32 [#allocation2], 4
      %s347 = int_to_ptr.vmem [resolvable:$true] %s346
      %352 = dma.vmem_to_hbm [thread:$0]  %s347, 256, %s8, [#allocation3], 128, 128, 8
    $region37: #{mlm_forward.7} parent=1 // pred_fallthru
      _
    // Predicated region
    $region38: #{mlm_forward.7} parent=1 // pred_check
      _
    $region39: #{mlm_forward.7} parent=1 // pred_check_branch
      %354 = sbr.rel (0) target = $region41
    $region40: #{mlm_forward.7} parent=1 // pred_region
      %s356 = ssub.s32 16, 16
      %357 = vsyncadd [#allocation5], %s356
      %s359 = sshll.u32 [#allocation4], 4
      %s360 = int_to_ptr.vmem [resolvable:$true] %s359
      %362 = dma.vmem_to_hbm [thread:$0]  %s360, 16, %s9, [#allocation5]
    $region41: #{mlm_forward.7} parent=1 // pred_fallthru
      _
    // Predicated region
    $region42: #{mlm_forward.7} parent=1 // pred_check
      _
    $region43: #{mlm_forward.7} parent=1 // pred_check_branch
      %364 = sbr.rel (0) target = $region45
    $region44: #{mlm_forward.7} parent=1 // pred_region
      %365 = dma.done [#allocation3], 256
    $region45: #{mlm_forward.7} parent=1 // pred_fallthru
      _
    // Predicated region
    $region46: #{mlm_forward.7} parent=1 // pred_check
      _
    $region47: #{mlm_forward.7} parent=1 // pred_check_branch
      %367 = sbr.rel (0) target = $region49
    $region48: #{mlm_forward.7} parent=1 // pred_region
      %368 = dma.done [#allocation5], 16
    $region49: #{mlm_forward.7} parent=1 // pred_fallthru
      _
    %369 = vsyncpa [#allocation3], 1
    %370 = vsyncpa [#allocation5], 1

// kernel: mlm_forward.5
$region0: #{mlm_forward.5}
  #allocation0 [shape = 'u32[]', space=smem, size = 0x4, offset = 0x4, fixed_abs, tag = 'smem constant byte address 0x4 - core index']
  #allocation1 [shape = 'u32[144,128]{1,0:T(1,128)}', space=vmem, size = 0x12000, scoped, tag = 'internal scratch']
  %s0 = inlined_call_operand.vmem [shape: f32[16,32], index: 0, kind: input, shape index: {}]
  %s1 = inlined_call_operand.vmem [shape: f32[2,8], index: 1, kind: input, shape index: {}]
  %s2 = inlined_call_operand.vmem [shape: f32[32,96], index: 2, kind: input, shape index: {}]
  %s3 = inlined_call_operand.vmem [shape: f32[1,96], index: 3, kind: input, shape index: {}]
  %s4 = inlined_call_operand.vmem [shape: f32[32,32], index: 4, kind: input, shape index: {}]
  %s5 = inlined_call_operand.vmem [shape: f32[1,32], index: 5, kind: input, shape index: {}]
  %s6 = inlined_call_operand.vmem [shape: f32[1,32], index: 6, kind: input, shape index: {}]
  %s7 = inlined_call_operand.vmem [shape: f32[1,32], index: 7, kind: input, shape index: {}]
  %s8 = inlined_call_operand.vmem [shape: f32[32,64], index: 8, kind: input, shape index: {}]
  %s9 = inlined_call_operand.vmem [shape: f32[1,64], index: 9, kind: input, shape index: {}]
  %s10 = inlined_call_operand.vmem [shape: f32[64,32], index: 10, kind: input, shape index: {}]
  %s11 = inlined_call_operand.vmem [shape: f32[1,32], index: 11, kind: input, shape index: {}]
  %s12 = inlined_call_operand.vmem [shape: f32[1,32], index: 12, kind: input, shape index: {}]
  %s13 = inlined_call_operand.vmem [shape: f32[1,32], index: 13, kind: input, shape index: {}]
  %s14 = inlined_call_operand.vmem [shape: f32[16,32], index: 14, kind: output, shape index: {}]
  %s15 = sld [smem:[#allocation0]]
  $region66: #{mlm_forward.5} parent=0
    _
  %s17 = ssub.s32 1, %s15
  %s18 = scalar_select 0, %s17, %s15
  // Predicated region
  $region2: #{mlm_forward.5} parent=0 // pred_check
    _
  $region3: #{mlm_forward.5} parent=0 // pred_check_branch
    %20 = sbr.rel (0) target = $region5
  $region4: #{mlm_forward.5} parent=0 // pred_region
    _
  $region5: #{mlm_forward.5} parent=0 // pred_fallthru
    _
  // Predicated region
  $region6: #{mlm_forward.5} parent=0 // pred_check
    _
  $region7: #{mlm_forward.5} parent=0 // pred_check_branch
    %22 = sbr.rel (0) target = $region9
  $region8: #{mlm_forward.5} parent=0 // pred_region
    _
  $region9: #{mlm_forward.5} parent=0 // pred_fallthru
    _
  // Predicated region
  $region10: #{mlm_forward.5} parent=0 // pred_check
    _
  $region11: #{mlm_forward.5} parent=0 // pred_check_branch
    %24 = sbr.rel (0) target = $region13
  $region12: #{mlm_forward.5} parent=0 // pred_region
    _
  $region13: #{mlm_forward.5} parent=0 // pred_fallthru
    _
  // Predicated region
  $region14: #{mlm_forward.5} parent=0 // pred_check
    _
  $region15: #{mlm_forward.5} parent=0 // pred_check_branch
    %26 = sbr.rel (0) target = $region17
  $region16: #{mlm_forward.5} parent=0 // pred_region
    _
  $region17: #{mlm_forward.5} parent=0 // pred_fallthru
    _
  // Predicated region
  $region18: #{mlm_forward.5} parent=0 // pred_check
    _
  $region19: #{mlm_forward.5} parent=0 // pred_check_branch
    %28 = sbr.rel (0) target = $region21
  $region20: #{mlm_forward.5} parent=0 // pred_region
    _
  $region21: #{mlm_forward.5} parent=0 // pred_fallthru
    _
  // Predicated region
  $region22: #{mlm_forward.5} parent=0 // pred_check
    _
  $region23: #{mlm_forward.5} parent=0 // pred_check_branch
    %30 = sbr.rel (0) target = $region25
  $region24: #{mlm_forward.5} parent=0 // pred_region
    _
  $region25: #{mlm_forward.5} parent=0 // pred_fallthru
    _
  // Predicated region
  $region26: #{mlm_forward.5} parent=0 // pred_check
    _
  $region27: #{mlm_forward.5} parent=0 // pred_check_branch
    %32 = sbr.rel (0) target = $region29
  $region28: #{mlm_forward.5} parent=0 // pred_region
    _
  $region29: #{mlm_forward.5} parent=0 // pred_fallthru
    _
  // Predicated region
  $region30: #{mlm_forward.5} parent=0 // pred_check
    _
  $region31: #{mlm_forward.5} parent=0 // pred_check_branch
    %34 = sbr.rel (0) target = $region33
  $region32: #{mlm_forward.5} parent=0 // pred_region
    _
  $region33: #{mlm_forward.5} parent=0 // pred_fallthru
    _
  // Predicated region
  $region34: #{mlm_forward.5} parent=0 // pred_check
    _
  $region35: #{mlm_forward.5} parent=0 // pred_check_branch
    %36 = sbr.rel (0) target = $region37
  $region36: #{mlm_forward.5} parent=0 // pred_region
    _
  $region37: #{mlm_forward.5} parent=0 // pred_fallthru
    _
  // Predicated region
  $region38: #{mlm_forward.5} parent=0 // pred_check
    _
  $region39: #{mlm_forward.5} parent=0 // pred_check_branch
    %38 = sbr.rel (0) target = $region41
  $region40: #{mlm_forward.5} parent=0 // pred_region
    _
  $region41: #{mlm_forward.5} parent=0 // pred_fallthru
    _
  // Predicated region
  $region42: #{mlm_forward.5} parent=0 // pred_check
    _
  $region43: #{mlm_forward.5} parent=0 // pred_check_branch
    %40 = sbr.rel (0) target = $region45
  $region44: #{mlm_forward.5} parent=0 // pred_region
    _
  $region45: #{mlm_forward.5} parent=0 // pred_fallthru
    _
  // Predicated region
  $region46: #{mlm_forward.5} parent=0 // pred_check
    _
  $region47: #{mlm_forward.5} parent=0 // pred_check_branch
    %42 = sbr.rel (0) target = $region49
  $region48: #{mlm_forward.5} parent=0 // pred_region
    _
  $region49: #{mlm_forward.5} parent=0 // pred_fallthru
    _
  // Predicated region
  $region50: #{mlm_forward.5} parent=0 // pred_check
    _
  $region51: #{mlm_forward.5} parent=0 // pred_check_branch
    %44 = sbr.rel (0) target = $region53
  $region52: #{mlm_forward.5} parent=0 // pred_region
    _
  $region53: #{mlm_forward.5} parent=0 // pred_fallthru
    _
  // Predicated region
  $region54: #{mlm_forward.5} parent=0 // pred_check
    _
  $region55: #{mlm_forward.5} parent=0 // pred_check_branch
    %46 = sbr.rel (0) target = $region57
  $region56: #{mlm_forward.5} parent=0 // pred_region
    _
  $region57: #{mlm_forward.5} parent=0 // pred_fallthru
    _
  %v48 = vld [vmem:[%s0] sm:$0xff]
  %v49 = vld [vmem:[%s0 + $0x8] sm:$0xff]
  %v50 = vld [vmem:[%s1] sm:$0x3]
  %v51 = vld [vmem:[%s2] sm:$0xff]
  %v52 = vld [vmem:[%s2 + $0x8] sm:$0xff]
  %v53 = vld [vmem:[%s2 + $0x10] sm:$0xff]
  %v54 = vld [vmem:[%s2 + $0x18] sm:$0xff]
  %v55 = vpack.c.bf16 %v49, %v48
  %v56 = vpack.c.bf16 %v52, %v51
  %v57 = vpack.c.bf16 %v54, %v53
  %v58 = vld [vmem:[%s3] sm:$0x1]
  %v60 = vlaneseq
  %v61 = vshrl.u32 %v60, 7
  %v62 = vsub.s32 0, %v61
  %v63 = vrot.slane %v58, %v62
  %vm65 = vcmask 261120
  %v67 = vsel %vm65, %v55, 0
  %69 = vmatprep.subr.bf16.mxu0 0
  %70 = vmatpush1.bf16.msra.mxu0 %v56
  %71 = vmatprep.subr.bf16.mxu0 0
  %72 = vmatpush1.bf16.msra.mxu0 %v57
  %73 = vmatprep.subr.bf16.mxu0 0
  %74 = vmatpush1.bf16.msra.mxu0 0
  %75 = vmatprep.subr.bf16.mxu0 0
  %76 = vmatpush1.bf16.msra.mxu0 0
  %77 = vmatprep.subr.bf16.mxu0 0
  %78 = vmatpush1.bf16.msra.mxu0 0
  %79 = vmatprep.subr.bf16.mxu0 0
  %80 = vmatpush1.bf16.msra.mxu0 0
  %81 = vmatprep.subr.bf16.mxu0 0
  %82 = vmatpush1.bf16.msra.mxu0 0
  %83 = vmatprep.subr.bf16.mxu0 0
  %84 = vmatpush1.bf16.msra.mxu0 0
  %85 = vmatprep.subr.bf16.mxu0 0
  %86 = vmatpush1.bf16.msra.mxu0 0
  %87 = vmatprep.subr.bf16.mxu0 0
  %88 = vmatpush1.bf16.msra.mxu0 0
  %89 = vmatprep.subr.bf16.mxu0 0
  %90 = vmatpush1.bf16.msra.mxu0 0
  %91 = vmatprep.subr.bf16.mxu0 0
  %92 = vmatpush1.bf16.msra.mxu0 0
  %93 = vmatprep.subr.bf16.mxu0 0
  %94 = vmatpush1.bf16.msra.mxu0 0
  %95 = vmatprep.subr.bf16.mxu0 0
  %96 = vmatpush1.bf16.msra.mxu0 0
  %97 = vmatprep.subr.bf16.mxu0 0
  %98 = vmatpush1.bf16.msra.mxu0 0
  %99 = vmatprep.subr.bf16.mxu0 0
  %100 = vmatpush1.bf16.msra.mxu0 0
  %101 = vmatprep.mubr.bf16.mxu0 0
  %102 = vmatmul.mubr.bf16.gmra.mrb[0].mxu0 %v67
  %v103 = vpop.f32.mrb[0].mxu0
  %v104 = vadd.f32 %v63, %v103
  %v105 = vpop.f32.mrb[0].mxu0
  %v106 = vpop.f32.mrb[0].mxu0
  %v107 = vadd.f32 %v63, %v106
  %v108 = vpop.f32.mrb[0].mxu0
  %109 = vdwg.mxu0
  %v110 = vpack.c.bf16 %v104, %v104
  %112 = vrot.lane.b32.xlu0 %v110, 96
  %v113 = vpop.permute.xlu0 %112
  %vm114 = vcmask 130048
  %v116 = vsel %vm114, %v110, 0
  %v119 = vsel %vm114, %v113, 0
  %121 = vmatprep.subr.bf16.mxu0 0
  %122 = vmatpush1.bf16.xpose.msra.mxu0 %v119
  %123 = vmatprep.subr.bf16.mxu0 0
  %124 = vmatpush1.bf16.xpose.msra.mxu0 0
  %125 = vmatprep.subr.bf16.mxu0 0
  %126 = vmatpush1.bf16.xpose.msra.mxu0 0
  %127 = vmatprep.subr.bf16.mxu0 0
  %128 = vmatpush1.bf16.xpose.msra.mxu0 0
  %129 = vmatprep.subr.bf16.mxu0 0
  %130 = vmatpush1.bf16.xpose.msra.mxu0 0
  %131 = vmatprep.subr.bf16.mxu0 0
  %132 = vmatpush1.bf16.xpose.msra.mxu0 0
  %133 = vmatprep.subr.bf16.mxu0 0
  %134 = vmatpush1.bf16.xpose.msra.mxu0 0
  %135 = vmatprep.subr.bf16.mxu0 0
  %136 = vmatpush1.bf16.xpose.msra.mxu0 0
  %137 = vmatprep.subr.bf16.mxu0 0
  %138 = vmatpush1.bf16.xpose.msra.mxu0 0
  %139 = vmatprep.subr.bf16.mxu0 0
  %140 = vmatpush1.bf16.xpose.msra.mxu0 0
  %141 = vmatprep.subr.bf16.mxu0 0
  %142 = vmatpush1.bf16.xpose.msra.mxu0 0
  %143 = vmatprep.subr.bf16.mxu0 0
  %144 = vmatpush1.bf16.xpose.msra.mxu0 0
  %145 = vmatprep.subr.bf16.mxu0 0
  %146 = vmatpush1.bf16.xpose.msra.mxu0 0
  %147 = vmatprep.subr.bf16.mxu0 0
  %148 = vmatpush1.bf16.xpose.msra.mxu0 0
  %149 = vmatprep.subr.bf16.mxu0 0
  %150 = vmatpush1.bf16.xpose.msra.mxu0 0
  %151 = vmatprep.subr.bf16.mxu0 0
  %152 = vmatpush1.bf16.xpose.msra.mxu0 0
  %153 = vmatprep.mubr.bf16.mxu0 0
  %154 = vmatmul.mubr.bf16.gmra.mrb[0].mxu0 %v116
  %v155 = vpop.f32.mrb[0].mxu0
  %v156 = vadd.f32 0.0, %v155
  %v157 = vpop.f32.mrb[0].mxu0
  %v158 = vpop.f32.mrb[0].mxu0
  %v159 = vpop.f32.mrb[0].mxu0
  %160 = vdwg.mxu0
  %v161 = vmul.f32 %v156, 0.25
  %v162 = vlaneseq
  %v163 = vshrl.u32 %v162, 7
  %v164 = vsub.s32 0, %v163
  %v165 = vrot.slane %v50, %v164
  %v166 = vadd.f32 %v161, %v165
  %vm167 = vcmask 64512
  %v168 = vsel %vm167, %v166, -inf
  %169 = vmax.xlane.f32.xlu0 %v168
  %v170 = vpop.xlane.xlu0 %169
  %v171 = vsub.f32 %v166, %v170
  %v172 = vmul.f32 %v171, 1.442695
  %v173 = vpow.pop %v172
  %v174 = vsel %vm167, %v173, 0.0
  %175 = vadd.xlane.f32.xlu0 %v174
  %v176 = vpop.xlane.xlu0 %175
  %v177 = vrcp.pop %v176
  %v178 = vmul.f32 %v173, %v177
  %v179 = vpack.c.bf16 %v178, %v178
  %180 = vrot.lane.b32.xlu0 %v110, 64
  %v181 = vpop.permute.xlu0 %180
  %v183 = vsel %vm167, %v179, 0
  %vm185 = vcmask 1043456
  %v187 = vsel %vm185, %v181, 0
  %189 = vmatprep.subr.bf16.mxu0 0
  %190 = vmatpush1.bf16.msra.mxu0 %v187
  %191 = vmatprep.subr.bf16.mxu0 0
  %192 = vmatpush1.bf16.msra.mxu0 0
  %193 = vmatprep.subr.bf16.mxu0 0
  %194 = vmatpush1.bf16.msra.mxu0 0
  %195 = vmatprep.subr.bf16.mxu0 0
  %196 = vmatpush1.bf16.msra.mxu0 0
  %197 = vmatprep.subr.bf16.mxu0 0
  %198 = vmatpush1.bf16.msra.mxu0 0
  %199 = vmatprep.subr.bf16.mxu0 0
  %200 = vmatpush1.bf16.msra.mxu0 0
  %201 = vmatprep.subr.bf16.mxu0 0
  %202 = vmatpush1.bf16.msra.mxu0 0
  %203 = vmatprep.subr.bf16.mxu0 0
  %204 = vmatpush1.bf16.msra.mxu0 0
  %205 = vmatprep.subr.bf16.mxu0 0
  %206 = vmatpush1.bf16.msra.mxu0 0
  %207 = vmatprep.subr.bf16.mxu0 0
  %208 = vmatpush1.bf16.msra.mxu0 0
  %209 = vmatprep.subr.bf16.mxu0 0
  %210 = vmatpush1.bf16.msra.mxu0 0
  %211 = vmatprep.subr.bf16.mxu0 0
  %212 = vmatpush1.bf16.msra.mxu0 0
  %213 = vmatprep.subr.bf16.mxu0 0
  %214 = vmatpush1.bf16.msra.mxu0 0
  %215 = vmatprep.subr.bf16.mxu0 0
  %216 = vmatpush1.bf16.msra.mxu0 0
  %217 = vmatprep.subr.bf16.mxu0 0
  %218 = vmatpush1.bf16.msra.mxu0 0
  %219 = vmatprep.subr.bf16.mxu0 0
  %220 = vmatpush1.bf16.msra.mxu0 0
  %221 = vmatprep.mubr.bf16.mxu0 0
  %222 = vmatmul.mubr.bf16.gmra.mrb[0].mxu0 %v183
  %v223 = vpop.f32.mrb[0].mxu0
  %v224 = vadd.f32 0.0, %v223
  %v225 = vpop.f32.mrb[0].mxu0
  %v226 = vpop.f32.mrb[0].mxu0
  %v227 = vpop.f32.mrb[0].mxu0
  %228 = vdwg.mxu0
  %229 = vrot.lane.b32.xlu0 %v110, 112
  %v230 = vpop.permute.xlu0 %229
  %231 = vrot.lane.b32.xlu0 %v110, 80
  %v232 = vpop.permute.xlu0 %231
  %v234 = vsel %vm114, %v230, 0
  %v237 = vsel %vm114, %v232, 0
  %239 = vmatprep.subr.bf16.mxu0 0
  %240 = vmatpush1.bf16.xpose.msra.mxu0 %v237
  %241 = vmatprep.subr.bf16.mxu0 0
  %242 = vmatpush1.bf16.xpose.msra.mxu0 0
  %243 = vmatprep.subr.bf16.mxu0 0
  %244 = vmatpush1.bf16.xpose.msra.mxu0 0
  %245 = vmatprep.subr.bf16.mxu0 0
  %246 = vmatpush1.bf16.xpose.msra.mxu0 0
  %247 = vmatprep.subr.bf16.mxu0 0
  %248 = vmatpush1.bf16.xpose.msra.mxu0 0
  %249 = vmatprep.subr.bf16.mxu0 0
  %250 = vmatpush1.bf16.xpose.msra.mxu0 0
  %251 = vmatprep.subr.bf16.mxu0 0
  %252 = vmatpush1.bf16.xpose.msra.mxu0 0
  %253 = vmatprep.subr.bf16.mxu0 0
  %254 = vmatpush1.bf16.xpose.msra.mxu0 0
  %255 = vmatprep.subr.bf16.mxu0 0
  %256 = vmatpush1.bf16.xpose.msra.mxu0 0
  %257 = vmatprep.subr.bf16.mxu0 0
  %258 = vmatpush1.bf16.xpose.msra.mxu0 0
  %259 = vmatprep.subr.bf16.mxu0 0
  %260 = vmatpush1.bf16.xpose.msra.mxu0 0
  %261 = vmatprep.subr.bf16.mxu0 0
  %262 = vmatpush1.bf16.xpose.msra.mxu0 0
  %263 = vmatprep.subr.bf16.mxu0 0
  %264 = vmatpush1.bf16.xpose.msra.mxu0 0
  %265 = vmatprep.subr.bf16.mxu0 0
  %266 = vmatpush1.bf16.xpose.msra.mxu0 0
  %267 = vmatprep.subr.bf16.mxu0 0
  %268 = vmatpush1.bf16.xpose.msra.mxu0 0
  %269 = vmatprep.subr.bf16.mxu0 0
  %270 = vmatpush1.bf16.xpose.msra.mxu0 0
  %271 = vmatprep.mubr.bf16.mxu0 0
  %272 = vmatmul.mubr.bf16.gmra.mrb[0].mxu0 %v234
  %v273 = vpop.f32.mrb[0].mxu0
  %v274 = vadd.f32 0.0, %v273
  %v275 = vpop.f32.mrb[0].mxu0
  %v276 = vpop.f32.mrb[0].mxu0
  %v277 = vpop.f32.mrb[0].mxu0
  %278 = vdwg.mxu0
  %v279 = vmul.f32 %v274, 0.25
  %v280 = vadd.f32 %v279, %v165
  %v281 = vsel %vm167, %v280, -inf
  %282 = vmax.xlane.f32.xlu0 %v281
  %v283 = vpop.xlane.xlu0 %282
  %v284 = vsub.f32 %v280, %v283
  %v285 = vmul.f32 %v284, 1.442695
  %v286 = vpow.pop %v285
  %v287 = vsel %vm167, %v286, 0.0
  %288 = vadd.xlane.f32.xlu0 %v287
  %v289 = vpop.xlane.xlu0 %288
  %v290 = vrcp.pop %v289
  %v291 = vmul.f32 %v286, %v290
  %v292 = vpack.c.bf16 %v291, %v291
  %293 = vrot.lane.b32.xlu0 %v110, 48
  %v294 = vpop.permute.xlu0 %293
  %v296 = vsel %vm167, %v292, 0
  %v299 = vsel %vm185, %v294, 0
  %301 = vmatprep.subr.bf16.mxu0 0
  %302 = vmatpush1.bf16.msra.mxu0 %v299
  %303 = vmatprep.subr.bf16.mxu0 0
  %304 = vmatpush1.bf16.msra.mxu0 0
  %305 = vmatprep.subr.bf16.mxu0 0
  %306 = vmatpush1.bf16.msra.mxu0 0
  %307 = vmatprep.subr.bf16.mxu0 0
  %308 = vmatpush1.bf16.msra.mxu0 0
  %309 = vmatprep.subr.bf16.mxu0 0
  %310 = vmatpush1.bf16.msra.mxu0 0
  %311 = vmatprep.subr.bf16.mxu0 0
  %312 = vmatpush1.bf16.msra.mxu0 0
  %313 = vmatprep.subr.bf16.mxu0 0
  %314 = vmatpush1.bf16.msra.mxu0 0
  %315 = vmatprep.subr.bf16.mxu0 0
  %316 = vmatpush1.bf16.msra.mxu0 0
  %317 = vmatprep.subr.bf16.mxu0 0
  %318 = vmatpush1.bf16.msra.mxu0 0
  %319 = vmatprep.subr.bf16.mxu0 0
  %320 = vmatpush1.bf16.msra.mxu0 0
  %321 = vmatprep.subr.bf16.mxu0 0
  %322 = vmatpush1.bf16.msra.mxu0 0
  %323 = vmatprep.subr.bf16.mxu0 0
  %324 = vmatpush1.bf16.msra.mxu0 0
  %325 = vmatprep.subr.bf16.mxu0 0
  %326 = vmatpush1.bf16.msra.mxu0 0
  %327 = vmatprep.subr.bf16.mxu0 0
  %328 = vmatpush1.bf16.msra.mxu0 0
  %329 = vmatprep.subr.bf16.mxu0 0
  %330 = vmatpush1.bf16.msra.mxu0 0
  %331 = vmatprep.subr.bf16.mxu0 0
  %332 = vmatpush1.bf16.msra.mxu0 0
  %333 = vmatprep.mubr.bf16.mxu0 0
  %334 = vmatmul.mubr.bf16.gmra.mrb[0].mxu0 %v296
  %v335 = vpop.f32.mrb[0].mxu0
  %v336 = vadd.f32 0.0, %v335
  %v337 = vpop.f32.mrb[0].mxu0
  %v338 = vpop.f32.mrb[0].mxu0
  %v339 = vpop.f32.mrb[0].mxu0
  %340 = vdwg.mxu0
  %342 = vrot.lane.b32.xlu0 %v336, 16
  %v343 = vpop.permute.xlu0 %342
  %v345 = vsel %vm114, %v224, %v343
  %v346 = vpack.c.bf16 %v107, %v107
  %348 = vrot.lane.b32.xlu0 %v346, 96
  %v349 = vpop.permute.xlu0 %348
  %v351 = vsel %vm114, %v346, 0
  %v354 = vsel %vm114, %v349, 0
  %356 = vmatprep.subr.bf16.mxu0 0
  %357 = vmatpush1.bf16.xpose.msra.mxu0 %v354
  %358 = vmatprep.subr.bf16.mxu0 0
  %359 = vmatpush1.bf16.xpose.msra.mxu0 0
  %360 = vmatprep.subr.bf16.mxu0 0
  %361 = vmatpush1.bf16.xpose.msra.mxu0 0
  %362 = vmatprep.subr.bf16.mxu0 0
  %363 = vmatpush1.bf16.xpose.msra.mxu0 0
  %364 = vmatprep.subr.bf16.mxu0 0
  %365 = vmatpush1.bf16.xpose.msra.mxu0 0
  %366 = vmatprep.subr.bf16.mxu0 0
  %367 = vmatpush1.bf16.xpose.msra.mxu0 0
  %368 = vmatprep.subr.bf16.mxu0 0
  %369 = vmatpush1.bf16.xpose.msra.mxu0 0
  %370 = vmatprep.subr.bf16.mxu0 0
  %371 = vmatpush1.bf16.xpose.msra.mxu0 0
  %372 = vmatprep.subr.bf16.mxu0 0
  %373 = vmatpush1.bf16.xpose.msra.mxu0 0
  %374 = vmatprep.subr.bf16.mxu0 0
  %375 = vmatpush1.bf16.xpose.msra.mxu0 0
  %376 = vmatprep.subr.bf16.mxu0 0
  %377 = vmatpush1.bf16.xpose.msra.mxu0 0
  %378 = vmatprep.subr.bf16.mxu0 0
  %379 = vmatpush1.bf16.xpose.msra.mxu0 0
  %380 = vmatprep.subr.bf16.mxu0 0
  %381 = vmatpush1.bf16.xpose.msra.mxu0 0
  %382 = vmatprep.subr.bf16.mxu0 0
  %383 = vmatpush1.bf16.xpose.msra.mxu0 0
  %384 = vmatprep.subr.bf16.mxu0 0
  %385 = vmatpush1.bf16.xpose.msra.mxu0 0
  %386 = vmatprep.subr.bf16.mxu0 0
  %387 = vmatpush1.bf16.xpose.msra.mxu0 0
  %388 = vmatprep.mubr.bf16.mxu0 0
  %389 = vmatmul.mubr.bf16.gmra.mrb[0].mxu0 %v351
  %v390 = vpop.f32.mrb[0].mxu0
  %v391 = vadd.f32 0.0, %v390
  %v392 = vpop.f32.mrb[0].mxu0
  %v393 = vpop.f32.mrb[0].mxu0
  %v394 = vpop.f32.mrb[0].mxu0
  %395 = vdwg.mxu0
  %v396 = vmul.f32 %v391, 0.25
  %v397 = vlaneseq
  %v398 = vshrl.u32 %v397, 7
  %v399 = vsub.s32 1, %v398
  %v400 = vrot.slane %v50, %v399
  %v401 = vadd.f32 %v396, %v400
  %v402 = vsel %vm167, %v401, -inf
  %403 = vmax.xlane.f32.xlu0 %v402
  %v404 = vpop.xlane.xlu0 %403
  %v405 = vsub.f32 %v401, %v404
  %v406 = vmul.f32 %v405, 1.442695
  %v407 = vpow.pop %v406
  %v408 = vsel %vm167, %v407, 0.0
  %409 = vadd.xlane.f32.xlu0 %v408
  %v410 = vpop.xlane.xlu0 %409
  %v411 = vrcp.pop %v410
  %v412 = vmul.f32 %v407, %v411
  %v413 = vpack.c.bf16 %v412, %v412
  %414 = vrot.lane.b32.xlu0 %v346, 64
  %v415 = vpop.permute.xlu0 %414
  %v417 = vsel %vm167, %v413, 0
  %v420 = vsel %vm185, %v415, 0
  %422 = vmatprep.subr.bf16.mxu0 0
  %423 = vmatpush1.bf16.msra.mxu0 %v420
  %424 = vmatprep.subr.bf16.mxu0 0
  %425 = vmatpush1.bf16.msra.mxu0 0
  %426 = vmatprep.subr.bf16.mxu0 0
  %427 = vmatpush1.bf16.msra.mxu0 0
  %428 = vmatprep.subr.bf16.mxu0 0
  %429 = vmatpush1.bf16.msra.mxu0 0
  %430 = vmatprep.subr.bf16.mxu0 0
  %431 = vmatpush1.bf16.msra.mxu0 0
  %432 = vmatprep.subr.bf16.mxu0 0
  %433 = vmatpush1.bf16.msra.mxu0 0
  %434 = vmatprep.subr.bf16.mxu0 0
  %435 = vmatpush1.bf16.msra.mxu0 0
  %436 = vmatprep.subr.bf16.mxu0 0
  %437 = vmatpush1.bf16.msra.mxu0 0
  %438 = vmatprep.subr.bf16.mxu0 0
  %439 = vmatpush1.bf16.msra.mxu0 0
  %440 = vmatprep.subr.bf16.mxu0 0
  %441 = vmatpush1.bf16.msra.mxu0 0
  %442 = vmatprep.subr.bf16.mxu0 0
  %443 = vmatpush1.bf16.msra.mxu0 0
  %444 = vmatprep.subr.bf16.mxu0 0
  %445 = vmatpush1.bf16.msra.mxu0 0
  %446 = vmatprep.subr.bf16.mxu0 0
  %447 = vmatpush1.bf16.msra.mxu0 0
  %448 = vmatprep.subr.bf16.mxu0 0
  %449 = vmatpush1.bf16.msra.mxu0 0
  %450 = vmatprep.subr.bf16.mxu0 0
  %451 = vmatpush1.bf16.msra.mxu0 0
  %452 = vmatprep.subr.bf16.mxu0 0
  %453 = vmatpush1.bf16.msra.mxu0 0
  %454 = vmatprep.mubr.bf16.mxu0 0
  %455 = vmatmul.mubr.bf16.gmra.mrb[0].mxu0 %v417
  %v456 = vpop.f32.mrb[0].mxu0
  %v457 = vadd.f32 0.0, %v456
  %v458 = vpop.f32.mrb[0].mxu0
  %v459 = vpop.f32.mrb[0].mxu0
  %v460 = vpop.f32.mrb[0].mxu0
  %461 = vdwg.mxu0
  %462 = vrot.lane.b32.xlu0 %v346, 112
  %v463 = vpop.permute.xlu0 %462
  %464 = vrot.lane.b32.xlu0 %v346, 80
  %v465 = vpop.permute.xlu0 %464
  %v467 = vsel %vm114, %v463, 0
  %v470 = vsel %vm114, %v465, 0
  %472 = vmatprep.subr.bf16.mxu0 0
  %473 = vmatpush1.bf16.xpose.msra.mxu0 %v470
  %474 = vmatprep.subr.bf16.mxu0 0
  %475 = vmatpush1.bf16.xpose.msra.mxu0 0
  %476 = vmatprep.subr.bf16.mxu0 0
  %477 = vmatpush1.bf16.xpose.msra.mxu0 0
  %478 = vmatprep.subr.bf16.mxu0 0
  %479 = vmatpush1.bf16.xpose.msra.mxu0 0
  %480 = vmatprep.subr.bf16.mxu0 0
  %481 = vmatpush1.bf16.xpose.msra.mxu0 0
  %482 = vmatprep.subr.bf16.mxu0 0
  %483 = vmatpush1.bf16.xpose.msra.mxu0 0
  %484 = vmatprep.subr.bf16.mxu0 0
  %485 = vmatpush1.bf16.xpose.msra.mxu0 0
  %486 = vmatprep.subr.bf16.mxu0 0
  %487 = vmatpush1.bf16.xpose.msra.mxu0 0
  %488 = vmatprep.subr.bf16.mxu0 0
  %489 = vmatpush1.bf16.xpose.msra.mxu0 0
  %490 = vmatprep.subr.bf16.mxu0 0
  %491 = vmatpush1.bf16.xpose.msra.mxu0 0
  %492 = vmatprep.subr.bf16.mxu0 0
  %493 = vmatpush1.bf16.xpose.msra.mxu0 0
  %494 = vmatprep.subr.bf16.mxu0 0
  %495 = vmatpush1.bf16.xpose.msra.mxu0 0
  %496 = vmatprep.subr.bf16.mxu0 0
  %497 = vmatpush1.bf16.xpose.msra.mxu0 0
  %498 = vmatprep.subr.bf16.mxu0 0
  %499 = vmatpush1.bf16.xpose.msra.mxu0 0
  %500 = vmatprep.subr.bf16.mxu0 0
  %501 = vmatpush1.bf16.xpose.msra.mxu0 0
  %502 = vmatprep.subr.bf16.mxu0 0
  %503 = vmatpush1.bf16.xpose.msra.mxu0 0
  %504 = vmatprep.mubr.bf16.mxu0 0
  %505 = vmatmul.mubr.bf16.gmra.mrb[0].mxu0 %v467
  %v506 = vpop.f32.mrb[0].mxu0
  %v507 = vadd.f32 0.0, %v506
  %v508 = vpop.f32.mrb[0].mxu0
  %v509 = vpop.f32.mrb[0].mxu0
  %v510 = vpop.f32.mrb[0].mxu0
  %511 = vdwg.mxu0
  %v512 = vmul.f32 %v507, 0.25
  %v513 = vadd.f32 %v512, %v400
  %v514 = vsel %vm167, %v513, -inf
  %515 = vmax.xlane.f32.xlu0 %v514
  %v516 = vpop.xlane.xlu0 %515
  %v517 = vsub.f32 %v513, %v516
  %v518 = vmul.f32 %v517, 1.442695
  %v519 = vpow.pop %v518
  %v520 = vsel %vm167, %v519, 0.0
  %521 = vadd.xlane.f32.xlu0 %v520
  %v522 = vpop.xlane.xlu0 %521
  %v523 = vrcp.pop %v522
  %v524 = vmul.f32 %v519, %v523
  %v525 = vpack.c.bf16 %v524, %v524
  %526 = vrot.lane.b32.xlu0 %v346, 48
  %v527 = vpop.permute.xlu0 %526
  %v529 = vsel %vm167, %v525, 0
  %v532 = vsel %vm185, %v527, 0
  %534 = vmatprep.subr.bf16.mxu0 0
  %535 = vmatpush1.bf16.msra.mxu0 %v532
  %536 = vmatprep.subr.bf16.mxu0 0
  %537 = vmatpush1.bf16.msra.mxu0 0
  %538 = vmatprep.subr.bf16.mxu0 0
  %539 = vmatpush1.bf16.msra.mxu0 0
  %540 = vmatprep.subr.bf16.mxu0 0
  %541 = vmatpush1.bf16.msra.mxu0 0
  %542 = vmatprep.subr.bf16.mxu0 0
  %543 = vmatpush1.bf16.msra.mxu0 0
  %544 = vmatprep.subr.bf16.mxu0 0
  %545 = vmatpush1.bf16.msra.mxu0 0
  %546 = vmatprep.subr.bf16.mxu0 0
  %547 = vmatpush1.bf16.msra.mxu0 0
  %548 = vmatprep.subr.bf16.mxu0 0
  %549 = vmatpush1.bf16.msra.mxu0 0
  %550 = vmatprep.subr.bf16.mxu0 0
  %551 = vmatpush1.bf16.msra.mxu0 0
  %552 = vmatprep.subr.bf16.mxu0 0
  %553 = vmatpush1.bf16.msra.mxu0 0
  %554 = vmatprep.subr.bf16.mxu0 0
  %555 = vmatpush1.bf16.msra.mxu0 0
  %556 = vmatprep.subr.bf16.mxu0 0
  %557 = vmatpush1.bf16.msra.mxu0 0
  %558 = vmatprep.subr.bf16.mxu0 0
  %559 = vmatpush1.bf16.msra.mxu0 0
  %560 = vmatprep.subr.bf16.mxu0 0
  %561 = vmatpush1.bf16.msra.mxu0 0
  %562 = vmatprep.subr.bf16.mxu0 0
  %563 = vmatpush1.bf16.msra.mxu0 0
  %564 = vmatprep.subr.bf16.mxu0 0
  %565 = vmatpush1.bf16.msra.mxu0 0
  %566 = vmatprep.mubr.bf16.mxu0 0
  %567 = vmatmul.mubr.bf16.gmra.mrb[0].mxu0 %v529
  %v568 = vpop.f32.mrb[0].mxu0
  %v569 = vadd.f32 0.0, %v568
  %v570 = vpop.f32.mrb[0].mxu0
  %v571 = vpop.f32.mrb[0].mxu0
  %v572 = vpop.f32.mrb[0].mxu0
  %573 = vdwg.mxu0
  %575 = vrot.lane.b32.xlu0 %v569, 16
  %v576 = vpop.permute.xlu0 %575
  %v578 = vsel %vm114, %v457, %v576
  %v579 = vld [vmem:[%s4] sm:$0xff]
  %v580 = vld [vmem:[%s4 + $0x8] sm:$0xff]
  %v581 = vld [vmem:[%s4 + $0x10] sm:$0xff]
  %v582 = vld [vmem:[%s4 + $0x18] sm:$0xff]
  %v583 = vpack.c.bf16 %v578, %v345
  %v584 = vpack.c.bf16 %v580, %v579
  %v585 = vpack.c.bf16 %v582, %v581
  %v586 = vld [vmem:[%s5] sm:$0x1]
  %v588 = vlaneseq
  %v589 = vshrl.u32 %v588, 7
  %v590 = vsub.s32 0, %v589
  %v591 = vrot.slane %v586, %v590
  %v594 = vsel %vm65, %v583, 0
  %596 = vmatprep.subr.bf16.mxu0 0
  %597 = vmatpush1.bf16.msra.mxu0 %v584
  %598 = vmatprep.subr.bf16.mxu0 0
  %599 = vmatpush1.bf16.msra.mxu0 %v585
  %600 = vmatprep.subr.bf16.mxu0 0
  %601 = vmatpush1.bf16.msra.mxu0 0
  %602 = vmatprep.subr.bf16.mxu0 0
  %603 = vmatpush1.bf16.msra.mxu0 0
  %604 = vmatprep.subr.bf16.mxu0 0
  %605 = vmatpush1.bf16.msra.mxu0 0
  %606 = vmatprep.subr.bf16.mxu0 0
  %607 = vmatpush1.bf16.msra.mxu0 0
  %608 = vmatprep.subr.bf16.mxu0 0
  %609 = vmatpush1.bf16.msra.mxu0 0
  %610 = vmatprep.subr.bf16.mxu0 0
  %611 = vmatpush1.bf16.msra.mxu0 0
  %612 = vmatprep.subr.bf16.mxu0 0
  %613 = vmatpush1.bf16.msra.mxu0 0
  %614 = vmatprep.subr.bf16.mxu0 0
  %615 = vmatpush1.bf16.msra.mxu0 0
  %616 = vmatprep.subr.bf16.mxu0 0
  %617 = vmatpush1.bf16.msra.mxu0 0
  %618 = vmatprep.subr.bf16.mxu0 0
  %619 = vmatpush1.bf16.msra.mxu0 0
  %620 = vmatprep.subr.bf16.mxu0 0
  %621 = vmatpush1.bf16.msra.mxu0 0
  %622 = vmatprep.subr.bf16.mxu0 0
  %623 = vmatpush1.bf16.msra.mxu0 0
  %624 = vmatprep.subr.bf16.mxu0 0
  %625 = vmatpush1.bf16.msra.mxu0 0
  %626 = vmatprep.subr.bf16.mxu0 0
  %627 = vmatpush1.bf16.msra.mxu0 0
  %628 = vmatprep.mubr.bf16.mxu0 0
  %629 = vmatmul.mubr.bf16.gmra.mrb[0].mxu0 %v594
  %v630 = vpop.f32.mrb[0].mxu0
  %v631 = vadd.f32 %v591, %v630
  %v632 = vpop.f32.mrb[0].mxu0
  %v633 = vpop.f32.mrb[0].mxu0
  %v634 = vadd.f32 %v591, %v633
  %v635 = vpop.f32.mrb[0].mxu0
  %636 = vdwg.mxu0
  %v637 = vadd.f32 %v48, %v631
  %v638 = vadd.f32 %v49, %v634
  %v639 = vld [vmem:[%s6] sm:$0x1]
  %v640 = vld [vmem:[%s7] sm:$0x1]
  %v641 = vsel %vm65, %v637, 0.0
  %642 = vadd.xlane.f32.xlu0 %v641
  %v643 = vpop.xlane.xlu0 %642
  %v644 = vsel %vm65, %v638, 0.0
  %645 = vadd.xlane.f32.xlu0 %v644
  %v646 = vpop.xlane.xlu0 %645
  %v647 = vrcp.pop 32.0
  %v648 = vmul.f32 %v643, %v647
  %v649 = vmul.f32 %v646, %v647
  %v650 = vsub.f32 %v637, %v648
  %v651 = vsub.f32 %v638, %v649
  %v652 = vmul.f32 %v650, %v650
  %v653 = vmul.f32 %v651, %v651
  %v654 = vsel %vm65, %v652, 0.0
  %655 = vadd.xlane.f32.xlu0 %v654
  %v656 = vpop.xlane.xlu0 %655
  %v657 = vsel %vm65, %v653, 0.0
  %658 = vadd.xlane.f32.xlu0 %v657
  %v659 = vpop.xlane.xlu0 %658
  %v660 = vmul.f32 %v656, %v647
  %v661 = vmul.f32 %v659, %v647
  %v662 = vadd.f32 %v660, 1e-12
  %v663 = vadd.f32 %v661, 1e-12
  %v664 = vrsqrt.pop %v662
  %v665 = vrsqrt.pop %v663
  %v666 = vmul.f32 %v650, %v664
  %v667 = vmul.f32 %v651, %v665
  %v669 = vlaneseq
  %v670 = vshrl.u32 %v669, 7
  %v671 = vsub.s32 0, %v670
  %v672 = vrot.slane %v639, %v671
  %v674 = vmul.f32 %v666, %v672
  %v675 = vmul.f32 %v667, %v672
  %v677 = vlaneseq
  %v678 = vshrl.u32 %v677, 7
  %v679 = vsub.s32 0, %v678
  %v680 = vrot.slane %v640, %v679
  %v682 = vadd.f32 %v674, %v680
  %v683 = vadd.f32 %v675, %v680
  %v684 = vld [vmem:[%s8] sm:$0xff]
  %v685 = vld [vmem:[%s8 + $0x8] sm:$0xff]
  %v686 = vld [vmem:[%s8 + $0x10] sm:$0xff]
  %v687 = vld [vmem:[%s8 + $0x18] sm:$0xff]
  %v688 = vpack.c.bf16 %v683, %v682
  %v689 = vpack.c.bf16 %v685, %v684
  %v690 = vpack.c.bf16 %v687, %v686
  %v691 = vld [vmem:[%s9] sm:$0x1]
  %v693 = vlaneseq
  %v694 = vshrl.u32 %v693, 7
  %v695 = vsub.s32 0, %v694
  %v696 = vrot.slane %v691, %v695
  %v699 = vsel %vm65, %v688, 0
  %701 = vmatprep.subr.bf16.mxu0 0
  %702 = vmatpush1.bf16.msra.mxu0 %v689
  %703 = vmatprep.subr.bf16.mxu0 0
  %704 = vmatpush1.bf16.msra.mxu0 %v690
  %705 = vmatprep.subr.bf16.mxu0 0
  %706 = vmatpush1.bf16.msra.mxu0 0
  %707 = vmatprep.subr.bf16.mxu0 0
  %708 = vmatpush1.bf16.msra.mxu0 0
  %709 = vmatprep.subr.bf16.mxu0 0
  %710 = vmatpush1.bf16.msra.mxu0 0
  %711 = vmatprep.subr.bf16.mxu0 0
  %712 = vmatpush1.bf16.msra.mxu0 0
  %713 = vmatprep.subr.bf16.mxu0 0
  %714 = vmatpush1.bf16.msra.mxu0 0
  %715 = vmatprep.subr.bf16.mxu0 0
  %716 = vmatpush1.bf16.msra.mxu0 0
  %717 = vmatprep.subr.bf16.mxu0 0
  %718 = vmatpush1.bf16.msra.mxu0 0
  %719 = vmatprep.subr.bf16.mxu0 0
  %720 = vmatpush1.bf16.msra.mxu0 0
  %721 = vmatprep.subr.bf16.mxu0 0
  %722 = vmatpush1.bf16.msra.mxu0 0
  %723 = vmatprep.subr.bf16.mxu0 0
  %724 = vmatpush1.bf16.msra.mxu0 0
  %725 = vmatprep.subr.bf16.mxu0 0
  %726 = vmatpush1.bf16.msra.mxu0 0
  %727 = vmatprep.subr.bf16.mxu0 0
  %728 = vmatpush1.bf16.msra.mxu0 0
  %729 = vmatprep.subr.bf16.mxu0 0
  %730 = vmatpush1.bf16.msra.mxu0 0
  %731 = vmatprep.subr.bf16.mxu0 0
  %732 = vmatpush1.bf16.msra.mxu0 0
  %733 = vmatprep.mubr.bf16.mxu0 0
  %734 = vmatmul.mubr.bf16.gmra.mrb[0].mxu0 %v699
  %v735 = vpop.f32.mrb[0].mxu0
  %v736 = vadd.f32 %v696, %v735
  %v737 = vpop.f32.mrb[0].mxu0
  %v738 = vpop.f32.mrb[0].mxu0
  %v739 = vadd.f32 %v696, %v738
  %v740 = vpop.f32.mrb[0].mxu0
  %741 = vdwg.mxu0
  %v742 = vmul.f32 %v736, 0.5
  %v743 = vmul.f32 %v739, 0.5
  %v744 = vmul.f32 %v736, 0.044715
  %v745 = vmul.f32 %v739, 0.044715
  %v746 = vmul.f32 %v744, %v736
  %v747 = vmul.f32 %v745, %v739
  %v748 = vmul.f32 %v746, %v736
  %v749 = vmul.f32 %v747, %v739
  %v750 = vadd.f32 %v736, %v748
  %v751 = vadd.f32 %v739, %v749
  %v752 = vmul.f32 %v750, 0.7978846
  %v753 = vmul.f32 %v751, 0.7978846
  %v754 = vtanh.pop %v752
  %v755 = vtanh.pop %v753
  %v756 = vadd.f32 %v754, 1.0
  %v757 = vadd.f32 %v755, 1.0
  %v758 = vmul.f32 %v742, %v756
  %v759 = vmul.f32 %v743, %v757
  %v760 = vld [vmem:[%s10] sm:$0xff]
  %v761 = vld [vmem:[%s10 + $0x8] sm:$0xff]
  %v762 = vld [vmem:[%s10 + $0x10] sm:$0xff]
  %v763 = vld [vmem:[%s10 + $0x18] sm:$0xff]
  %v764 = vld [vmem:[%s10 + $0x20] sm:$0xff]
  %v765 = vld [vmem:[%s10 + $0x28] sm:$0xff]
  %v766 = vld [vmem:[%s10 + $0x30] sm:$0xff]
  %v767 = vld [vmem:[%s10 + $0x38] sm:$0xff]
  %v768 = vpack.c.bf16 %v759, %v758
  %v769 = vpack.c.bf16 %v761, %v760
  %v770 = vpack.c.bf16 %v763, %v762
  %v771 = vpack.c.bf16 %v765, %v764
  %v772 = vpack.c.bf16 %v767, %v766
  %v773 = vld [vmem:[%s11] sm:$0x1]
  %v775 = vlaneseq
  %v776 = vshrl.u32 %v775, 7
  %v777 = vsub.s32 0, %v776
  %v778 = vrot.slane %v773, %v777
  %vm780 = vcmask 523264
  %v782 = vsel %vm780, %v768, 0
  %784 = vmatprep.subr.bf16.mxu0 0
  %785 = vmatpush1.bf16.msra.mxu0 %v769
  %786 = vmatprep.subr.bf16.mxu0 0
  %787 = vmatpush1.bf16.msra.mxu0 %v770
  %788 = vmatprep.subr.bf16.mxu0 0
  %789 = vmatpush1.bf16.msra.mxu0 %v771
  %790 = vmatprep.subr.bf16.mxu0 0
  %791 = vmatpush1.bf16.msra.mxu0 %v772
  %792 = vmatprep.subr.bf16.mxu0 0
  %793 = vmatpush1.bf16.msra.mxu0 0
  %794 = vmatprep.subr.bf16.mxu0 0
  %795 = vmatpush1.bf16.msra.mxu0 0
  %796 = vmatprep.subr.bf16.mxu0 0
  %797 = vmatpush1.bf16.msra.mxu0 0
  %798 = vmatprep.subr.bf16.mxu0 0
  %799 = vmatpush1.bf16.msra.mxu0 0
  %800 = vmatprep.subr.bf16.mxu0 0
  %801 = vmatpush1.bf16.msra.mxu0 0
  %802 = vmatprep.subr.bf16.mxu0 0
  %803 = vmatpush1.bf16.msra.mxu0 0
  %804 = vmatprep.subr.bf16.mxu0 0
  %805 = vmatpush1.bf16.msra.mxu0 0
  %806 = vmatprep.subr.bf16.mxu0 0
  %807 = vmatpush1.bf16.msra.mxu0 0
  %808 = vmatprep.subr.bf16.mxu0 0
  %809 = vmatpush1.bf16.msra.mxu0 0
  %810 = vmatprep.subr.bf16.mxu0 0
  %811 = vmatpush1.bf16.msra.mxu0 0
  %812 = vmatprep.subr.bf16.mxu0 0
  %813 = vmatpush1.bf16.msra.mxu0 0
  %814 = vmatprep.subr.bf16.mxu0 0
  %815 = vmatpush1.bf16.msra.mxu0 0
  %816 = vmatprep.mubr.bf16.mxu0 0
  %817 = vmatmul.mubr.bf16.gmra.mrb[0].mxu0 %v782
  %v818 = vpop.f32.mrb[0].mxu0
  %v819 = vadd.f32 %v778, %v818
  %v820 = vpop.f32.mrb[0].mxu0
  %v821 = vpop.f32.mrb[0].mxu0
  %v822 = vadd.f32 %v778, %v821
  %v823 = vpop.f32.mrb[0].mxu0
  %824 = vdwg.mxu0
  %v825 = vadd.f32 %v682, %v819
  %v826 = vadd.f32 %v683, %v822
  %v827 = vld [vmem:[%s12] sm:$0x1]
  %v828 = vld [vmem:[%s13] sm:$0x1]
  %v829 = vsel %vm65, %v825, 0.0
  %830 = vadd.xlane.f32.xlu0 %v829
  %v831 = vpop.xlane.xlu0 %830
  %v832 = vsel %vm65, %v826, 0.0
  %833 = vadd.xlane.f32.xlu0 %v832
  %v834 = vpop.xlane.xlu0 %833
  %v835 = vmul.f32 %v831, %v647
  %v836 = vmul.f32 %v834, %v647
  %v837 = vsub.f32 %v825, %v835
  %v838 = vsub.f32 %v826, %v836
  %v839 = vmul.f32 %v837, %v837
  %v840 = vmul.f32 %v838, %v838
  %v841 = vsel %vm65, %v839, 0.0
  %842 = vadd.xlane.f32.xlu0 %v841
  %v843 = vpop.xlane.xlu0 %842
  %v844 = vsel %vm65, %v840, 0.0
  %845 = vadd.xlane.f32.xlu0 %v844
  %v846 = vpop.xlane.xlu0 %845
  %v847 = vmul.f32 %v843, %v647
  %v848 = vmul.f32 %v846, %v647
  %v849 = vadd.f32 %v847, 1e-12
  %v850 = vadd.f32 %v848, 1e-12
  %v851 = vrsqrt.pop %v849
  %v852 = vrsqrt.pop %v850
  %v853 = vmul.f32 %v837, %v851
  %v854 = vmul.f32 %v838, %v852
  %v856 = vlaneseq
  %v857 = vshrl.u32 %v856, 7
  %v858 = vsub.s32 0, %v857
  %v859 = vrot.slane %v827, %v858
  %v861 = vmul.f32 %v853, %v859
  %v862 = vmul.f32 %v854, %v859
  %v864 = vlaneseq
  %v865 = vshrl.u32 %v864, 7
  %v866 = vsub.s32 0, %v865
  %v867 = vrot.slane %v828, %v866
  %v869 = vadd.f32 %v861, %v867
  %v870 = vadd.f32 %v862, %v867
  %871 = vst.msk [vmem:[%s14] sm:$0xff] %vm65, %v869
  %872 = vst.msk [vmem:[%s14 + $0x8] sm:$0xff] %vm65, %v870
  // Predicated region
  $region58: #{mlm_forward.5} parent=0 // pred_check
    _
  $region59: #{mlm_forward.5} parent=0 // pred_check_branch
    %874 = sbr.rel (0) target = $region61
  $region60: #{mlm_forward.5} parent=0 // pred_region
    _
  $region61: #{mlm_forward.5} parent=0 // pred_fallthru
    _
  // Predicated region
  $region62: #{mlm_forward.5} parent=0 // pred_check
    _
  $region63: #{mlm_forward.5} parent=0 // pred_check_branch
    %876 = sbr.rel (0) target = $region65
  $region64: #{mlm_forward.5} parent=0 // pred_region
    _
  $region65: #{mlm_forward.5} parent=0 // pred_fallthru
    _

</llo_original>
